<compile_context>
chip_gen: v7x
topology: tpu7x:2x2x1
jax: 0.10.0
libtpu: 0.0.40
codegen_flags: <defaults>
</compile_context>

<pallas_src>
import functools

import numpy as np

import jax
import jax.numpy as jnp
from jax.experimental import pallas as pl
from jax.experimental.pallas import tpu as pltpu

_EPS = 1e-5

# Layer-3 (3x3 conv) input rows (of the 23-row map, col 1) carrying per-sample data
# ("a") and the shared constant value ("b"); everything else is bias-only ("c").
_A_ROWS_L3 = (1, 5, 9, 13, 17, 21)
_B_ROWS_L3 = (3, 7, 11, 15, 19)


# ----------------------------------------------------------------------------
# The single fused kernel
# ----------------------------------------------------------------------------
def _generator_kernel(
    x_ref, w1_ref, b1_ref, g1_ref, be1_ref,              # Linear + BN1d
    w1bd_ref, g2_ref, be2_ref, fold1_ref, spread1_ref,   # ConvT1 + BN2d(48)
    w2bd_ref, w2c_ref, g3_ref, be3_ref, fold2_ref, spread2_ref,  # ConvT2 + BN2d(32)
    g_ref, bc3_ref,                                      # ConvT3 + tanh
    o_ref,                                               # output (B, 256)
    yf_ref,                                              # scratch (B, 256) f32
    *, batch):
    f32 = jnp.float32
    bf = float(batch)
    wdt = w1bd_ref.dtype   # bf16 in production, f32 for the exactness check

    # ---- Linear (only the 6*64 = 384 features ConvT1 consumes) + BN1d + ReLU ----
    z = jnp.dot(x_ref[...].astype(wdt), w1_ref[...],
                preferred_element_type=f32) + b1_ref[...]
    mu0 = jnp.mean(z, axis=0, keepdims=True)
    # Single-pass E[x^2]-E[x]^2 (clamped).  Fine at this scale; would need a
    # two-pass variance if |mean| >> std for some feature with trained weights.
    var0 = jnp.maximum(jnp.mean(z * z, axis=0, keepdims=True) - mu0 * mu0, 0.0)
    h1 = jnp.maximum(
        (z - mu0) * jax.lax.rsqrt(var0 + _EPS) * g1_ref[...] + be1_ref[...], 0.0)

    # ---- ConvT1 (64->48, 1x1, s2, p1) + BN2d(48) + ReLU -------------------------
    # d1 = conv output MINUS the conv bias at the 6 live positions; every other of
    # the 13*3 positions holds exactly the bias, i.e. 0 after the shift (a
    # per-channel bias followed by training-mode BN cancels exactly).
    d1 = jnp.dot(h1.astype(wdt), w1bd_ref[...], preferred_element_type=f32)   # (B,288)
    n1 = 39.0 * bf                                   # B * 13 * 3 elems / channel
    st1 = jnp.concatenate([jnp.sum(d1, axis=0, keepdims=True),
                           jnp.sum(d1 * d1, axis=0, keepdims=True)], axis=0)  # (2,288)
    sq1 = jnp.dot(st1, fold1_ref[...], preferred_element_type=f32)            # (2,48)
    m1 = sq1[0:1] / n1
    v1 = jnp.maximum(sq1[1:2] / n1 - m1 * m1, 0.0)
    sc1 = g2_ref[...] * jax.lax.rsqrt(v1 + _EPS)
    sh1 = be2_ref[...] - m1 * sc1
    aff1 = jnp.dot(jnp.concatenate([sc1, sh1], axis=0), spread1_ref[...],
                   preferred_element_type=f32)                                # (2,288)
    y1 = jnp.maximum(d1 * aff1[0:1] + aff1[1:2], 0.0)       # the 6 live positions
    yb1 = jnp.maximum(sh1, 0.0)                              # every bias-only position

    # ---- ConvT2 (48->32, 1x1, s2, p1) + BN2d(32) + ReLU -------------------------
    d2 = jnp.dot(y1.astype(wdt), w2bd_ref[...], preferred_element_type=f32)   # (B,192)
    d2b = jnp.dot(yb1, w2c_ref[...], preferred_element_type=f32)              # (1,32)
    n2 = 69.0 * bf                                   # B * 23 * 3 elems / channel
    st2 = jnp.concatenate([jnp.sum(d2, axis=0, keepdims=True),
                           jnp.sum(d2 * d2, axis=0, keepdims=True)], axis=0)  # (2,192)
    sq2 = jnp.dot(st2, fold2_ref[...], preferred_element_type=f32)            # (2,32)
    s2 = sq2[0:1] + (5.0 * bf) * d2b                 # 5 "b" rows, constant over batch
    q2 = sq2[1:2] + (5.0 * bf) * d2b * d2b
    m2 = s2 / n2
    v2 = jnp.maximum(q2 / n2 - m2 * m2, 0.0)
    sc2 = g3_ref[...] * jax.lax.rsqrt(v2 + _EPS)
    sh2 = be3_ref[...] - m2 * sc2
    aff2 = jnp.dot(jnp.concatenate([sc2, sh2], axis=0), spread2_ref[...],
                   preferred_element_type=f32)                                # (2,192)
    y2a = jnp.maximum(d2 * aff2[0:1] + aff2[1:2], 0.0)      # (B,192)  the 6 "a" rows
    y2b = jnp.maximum(d2b * sc2 + sh2, 0.0)                 # (1,32)   the 5 "b" rows
    y2c = jnp.maximum(sh2, 0.0)                             # (1,32)   everywhere else

    # ---- ConvT3 (32->1, 3x3, s2, p1) + tanh: one lane-dense (B,256)@(256,256) ----
    yf_ref[:, 0:192] = y2a
    yf_ref[:, 192:224] = jnp.broadcast_to(y2b, (batch, 32))
    yf_ref[:, 224:256] = jnp.broadcast_to(y2c, (batch, 32))
    o = jnp.dot(yf_ref[...].astype(wdt), g_ref[...],
                preferred_element_type=f32) + bc3_ref[...]
    o_ref[...] = jnp.tanh(o).astype(o_ref.dtype)


def _full_block(a):
    nd = a.ndim
    return pl.BlockSpec(a.shape, lambda i, _nd=nd: (0,) * _nd)


# ----------------------------------------------------------------------------
# One-time weight-side preprocessing (hoisted out of the per-call forward)
# ----------------------------------------------------------------------------
def prepare_params(params, weight_dtype=jnp.bfloat16):
    """Builds the constant operand set consumed by the fused kernel.

    Call once; pass the result to (jitted) generator_forward.  Large matmul
    operands are stored in `weight_dtype` (bf16 halves the dominant HBM->VMEM
    weight DMA); BN affine parameters stay f32.
    """
    f32 = jnp.float32
    wdt = weight_dtype
    hi = jax.lax.Precision.HIGHEST

    # Geometry guard: the analytic folding below is hard-wired to this network.
    assert params["w1"].shape[1] == 64 * 8 * 3
    assert params["wc1"].shape == (64, 48, 1, 1)
    assert params["wc2"].shape == (48, 32, 1, 1)
    assert params["wc3"].shape == (32, 1, 3, 3)

    # 1) Linear columns actually consumed downstream (NCHW feature c*24 + i*3 + j,
    #    only i=1..6, j=1 survive ConvT(k1,s2,p1)).  BN1d is per-feature => exact.
    mm = np.arange(6)[:, None]
    cc = np.arange(64)[None, :]
    idx = (cc * 24 + 3 * mm + 4).reshape(-1)             # [m, c] order, 384 columns
    w1r = params["w1"][:, idx].astype(wdt)
    b1r = params["b1"][idx][None, :].astype(f32)
    g1r = params["g1"][idx][None, :].astype(f32)
    be1r = params["be1"][idx][None, :].astype(f32)

    # 2) 1x1 transposed convs -> block-diagonal channel matmuls over the 6 live
    #    spatial blocks (kept packed along lanes: no in-kernel reshapes).
    w1c = params["wc1"][:, :, 0, 0].astype(f32)          # (64, 48)
    w2c = params["wc2"][:, :, 0, 0].astype(f32)          # (48, 32)
    eye6 = jnp.eye(6, dtype=f32)
    w1bd = jnp.kron(eye6, w1c).astype(wdt)               # (384, 288)
    w2bd = jnp.kron(eye6, w2c).astype(wdt)               # (288, 192)
    # fold/spread one-hots: per-channel reduce / broadcast over the 6 blocks (MXU).
    fold1 = np.kron(np.ones((6, 1), np.float32), np.eye(48, dtype=np.float32))  # (288,48)
    fold2 = np.kron(np.ones((6, 1), np.float32), np.eye(32, dtype=np.float32))  # (192,32)
    spread1 = np.ascontiguousarray(fold1.T)              # (48, 288)
    spread2 = np.ascontiguousarray(fold2.T)              # (32, 192)

    # 3) Final ConvT(32->1,3x3,s2,p1) as a single dense placement map G:
    #    out[oh,ow] += in[c,ih,iw]*w3[c,kh,kw] with oh=2*ih-1+kh, ow=2*iw-1+kw.
    #      rows   0..191 : 6 per-sample "a" rows (layer-2 rows 1,5,...,21, col 1)
    #      rows 192..223 : 5 constant  "b" rows (layer-2 rows 3,7,...,19, col 1)
    #      rows 224..255 : every remaining position (constant "c" value)
    #    Columns padded 225 -> 256 for a lane-dense output store.
    w3 = params["wc3"][:, 0, :, :].astype(f32)           # (32, 3, 3)
    ph = np.zeros((3, 23, 45), np.float32)
    for kh in range(3):
        for i in range(23):
            oh = 2 * i - 1 + kh
            if 0 <= oh < 45:
                ph[kh, i, oh] = 1.0
    pw = np.zeros((3, 3, 5), np.float32)
    for kw in range(3):
        for j in range(3):
            ow = 2 * j - 1 + kw
            if 0 <= ow < 5:
                pw[kw, j, ow] = 1.0
    a_rows = np.array(_A_ROWS_L3)
    b_rows = np.array(_B_ROWS_L3)
    pw1 = pw[:, 1, :]                                    # only input col j=1 is live
    ga = jnp.einsum("ckl,kmo,lw->mcow", w3, ph[:, a_rows, :], pw1,
                    precision=hi).reshape(6 * 32, 225)
    asum = jnp.einsum("ckl,ko,lw->cow", w3, ph[:, a_rows, :].sum(1), pw1,
                      precision=hi).reshape(32, 225)
    gb = jnp.einsum("ckl,ko,lw->cow", w3, ph[:, b_rows, :].sum(1), pw1,
                    precision=hi).reshape(32, 225)
    tot = jnp.einsum("ckl,ko,lw->cow", w3, ph.sum(1), pw.sum(1),
                     precision=hi).reshape(32, 225)
    gc = tot - asum - gb
    gfull = jnp.concatenate([ga, gb, gc], axis=0)        # (256, 225)
    gfull = jnp.pad(gfull, ((0, 0), (0, 256 - 225))).astype(wdt)   # lane-dense (256,256)
    bc3_row = jnp.broadcast_to(params["bc3"].astype(f32)[None, :], (1, 256))

    return (
        w1r, b1r, g1r, be1r,
        w1bd, params["g2"][None, :].astype(f32), params["be2"][None, :].astype(f32),
        jnp.asarray(fold1).astype(wdt), jnp.asarray(spread1).astype(wdt),
        w2bd, w2c, params["g3"][None, :].astype(f32), params["be3"][None, :].astype(f32),
        jnp.asarray(fold2).astype(wdt), jnp.asarray(spread2).astype(wdt),
        gfull, bc3_row,
    )


# ----------------------------------------------------------------------------
# Forward: a single pallas_call (jit this; prepare_params is done once outside)
# ----------------------------------------------------------------------------
def generator_forward(prep, x):
    """x: (B, latent_dim) -> (B, 1, 45, 5), PyTorch Generator.forward (training BN)."""
    f32 = jnp.float32
    B = x.shape[0]                       # multiples of 8 fill the sublane/M-pass
    args = (x.astype(f32),) + tuple(prep)

    out = pl.pallas_call(
        functools.partial(_generator_kernel, batch=B),
        out_shape=jax.ShapeDtypeStruct((B, 256), f32),
        grid=(1,),
        in_specs=[_full_block(a) for a in args],
        out_specs=pl.BlockSpec((B, 256), lambda i: (0, 0)),
        scratch_shapes=[pltpu.VMEM((B, 256), f32)],
        compiler_params=pltpu.CompilerParams(dimension_semantics=("arbitrary",)),
    )(*args)

    return out[:, :45 * 5].reshape(B, 1, 45, 5)


# ----------------------------------------------------------------------------
# Parameters (faithful PyTorch-layout containers)
# ----------------------------------------------------------------------------
def init_params(key, latent_dim):
    ks = jax.random.split(key, 14)

    def n(k, shape, scale=0.05):
        return (scale * jax.random.normal(k, shape)).astype(jnp.float32)

    p = {}
    p["w1"] = n(ks[0], (latent_dim, 64 * 8 * 3))   # Linear weight stored as (in, out)
    p["b1"] = n(ks[1], (64 * 8 * 3,))
    p["g1"] = 1.0 + n(ks[2], (64 * 8 * 3,), 0.1)   # BN1d gamma
    p["be1"] = n(ks[3], (64 * 8 * 3,), 0.1)        # BN1d beta
    p["wc1"] = n(ks[4], (64, 48, 1, 1))            # ConvTranspose2d(64,48,1)
    p["bc1"] = n(ks[5], (48,))
    p["g2"] = 1.0 + n(ks[6], (48,), 0.1)
    p["be2"] = n(ks[7], (48,), 0.1)
    p["wc2"] = n(ks[8], (48, 32, 1, 1))            # ConvTranspose2d(48,32,1)
    p["bc2"] = n(ks[9], (32,))
    p["g3"] = 1.0 + n(ks[10], (32,), 0.1)
    p["be3"] = n(ks[11], (32,), 0.1)
    p["wc3"] = n(ks[12], (32, 1, 3, 3))            # ConvTranspose2d(32,1,3)
    p["bc3"] = n(ks[13], (1,))
    return p


# ----------------------------------------------------------------------------
# Independent pure-JAX reference (straightforward dilate+pad+im2col lowering)
# ----------------------------------------------------------------------------
def _reference_forward(params, x):
    eps = _EPS
    B = x.shape[0]
    z = x @ params["w1"] + params["b1"]
    mu = jnp.mean(z, axis=0, keepdims=True)
    var = jnp.mean((z - mu) ** 2, axis=0, keepdims=True)
    h = jnp.maximum((z - mu) * jax.lax.rsqrt(var + eps) * params["g1"] + params["be1"], 0.0)
    h = h.reshape(B, 64, 8, 3).transpose(0, 2, 3, 1)            # NHWC

    def conv_t(x_nhwc, w_t, b, stride, padding):
        B_, H, W, Cin = x_nhwc.shape
        _, Cout, kH, kW = w_t.shape
        Hd = (H - 1) * stride + 1
        Wd = (W - 1) * stride + 1
        xd = jnp.zeros((B_, Hd, Wd, Cin), x_nhwc.dtype).at[:, ::stride, ::stride, :].set(x_nhwc)
        phi = kH - 1 - padding
        pwi = kW - 1 - padding
        xp = jax.lax.pad(xd, jnp.zeros((), x_nhwc.dtype),
                         [(0, 0, 0), (phi, phi, 0), (pwi, pwi, 0), (0, 0, 0)])
        Hout = (H - 1) * stride - 2 * padding + kH
        Wout = (W - 1) * stride - 2 * padding + kW
        cols = []
        for i in range(kH):
            for j in range(kW):
                cols.append(xp[:, i:i + Hout, j:j + Wout, :])
        patches = jnp.stack(cols, axis=3).reshape(B_ * Hout * Wout, kH * kW * Cin)
        w_conv = jnp.transpose(w_t[:, :, ::-1, ::-1], (2, 3, 0, 1)).reshape(kH * kW * Cin, Cout)
        y = patches @ w_conv + b
        return y.reshape(B_, Hout, Wout, Cout)

    def bn_relu(x_nhwc, g, be):
        C = x_nhwc.shape[-1]
        v = x_nhwc.reshape(-1, C)
        mu_ = jnp.mean(v, axis=0)
        var_ = jnp.mean((v - mu_) ** 2, axis=0)
        return jnp.maximum((x_nhwc - mu_) * jax.lax.rsqrt(var_ + eps) * g + be, 0.0)

    h = conv_t(h, params["wc1"], params["bc1"], 2, 1)
    h = bn_relu(h, params["g2"], params["be2"])
    h = conv_t(h, params["wc2"], params["bc2"], 2, 1)
    h = bn_relu(h, params["g3"], params["be3"])
    h = conv_t(h, params["wc3"], params["bc3"], 2, 1)
    return jnp.tanh(h).transpose(0, 3, 1, 2)                    # NCHW (B,1,45,5)


if __name__ == "__main__":
    key = jax.random.PRNGKey(0)
    kx, kp = jax.random.split(key)

    latent_dim = 32
    B = 8                                      # multiple of 8: fills sublanes/M-passes
    x = jax.random.normal(kx, (B, latent_dim), dtype=jnp.float32)
    params = init_params(kp, latent_dim)

    with jax.default_matmul_precision("float32"):
        ref = _reference_forward(params, x)
    jax.block_until_ready(ref)

    fwd = jax.jit(generator_forward)

    # f32-weight variant: exactness check against the reference.
    prep32 = prepare_params(params, weight_dtype=jnp.float32)
    out32 = fwd(prep32, x)
    jax.block_until_ready(out32)
    assert out32.shape == (B, 1, 45, 5), out32.shape
    assert bool(jnp.all(jnp.isfinite(out32)))
    assert bool(jnp.all(jnp.abs(out32) <= 1.0 + 1e-6))          # tanh range
    err32 = float(jnp.max(jnp.abs(out32 - ref)))
    assert err32 < 5e-3, f"f32 path mismatch vs reference: {err32}"

    # bf16-weight variant (production config: halves the weight DMA).
    prep16 = prepare_params(params, weight_dtype=jnp.bfloat16)
    out16 = fwd(prep16, x)
    jax.block_until_ready(out16)
    assert out16.shape == (B, 1, 45, 5), out16.shape
    assert bool(jnp.all(jnp.isfinite(out16)))
    err16 = float(jnp.max(jnp.abs(out16 - ref)))
    assert err16 < 5e-2, f"bf16 path mismatch vs reference: {err16}"

    print("KERNEL_OK")
</pallas_src>

<mosaic_0001>
module attributes {stable_mosaic.version = 11 : i64} {
  func.func @_generator_kernel(%arg0: i32, %arg1: memref<8x32xf32, #tpu.memory_space<vmem>>, %arg2: memref<32x384xf32, #tpu.memory_space<vmem>>, %arg3: memref<1x384xf32, #tpu.memory_space<vmem>>, %arg4: memref<1x384xf32, #tpu.memory_space<vmem>>, %arg5: memref<1x384xf32, #tpu.memory_space<vmem>>, %arg6: memref<384x288xf32, #tpu.memory_space<vmem>>, %arg7: memref<1x48xf32, #tpu.memory_space<vmem>>, %arg8: memref<1x48xf32, #tpu.memory_space<vmem>>, %arg9: memref<288x48xf32, #tpu.memory_space<vmem>>, %arg10: memref<48x288xf32, #tpu.memory_space<vmem>>, %arg11: memref<288x192xf32, #tpu.memory_space<vmem>>, %arg12: memref<48x32xf32, #tpu.memory_space<vmem>>, %arg13: memref<1x32xf32, #tpu.memory_space<vmem>>, %arg14: memref<1x32xf32, #tpu.memory_space<vmem>>, %arg15: memref<192x32xf32, #tpu.memory_space<vmem>>, %arg16: memref<32x192xf32, #tpu.memory_space<vmem>>, %arg17: memref<256x256xf32, #tpu.memory_space<vmem>>, %arg18: memref<1x256xf32, #tpu.memory_space<vmem>>, %arg19: memref<8x256xf32, #tpu.memory_space<vmem>>, %arg20: memref<8x256xf32, #tpu.memory_space<vmem>>) attributes {dimension_semantics = [#tpu.dimension_semantics<arbitrary>], iteration_bounds = array<i64: 1>, scalar_prefetch = 0 : i64, scratch_operands = 1 : i64, tpu.core_type = #tpu.core_type<tc>, window_params = [{pipeline_mode = #tpu.pipeline_mode<synchronous>, transform_indices = @transform_0, window_bounds = array<i64: 8, 32>}, {pipeline_mode = #tpu.pipeline_mode<synchronous>, transform_indices = @transform_1, window_bounds = array<i64: 32, 384>}, {pipeline_mode = #tpu.pipeline_mode<synchronous>, transform_indices = @transform_2, window_bounds = array<i64: 1, 384>}, {pipeline_mode = #tpu.pipeline_mode<synchronous>, transform_indices = @transform_3, window_bounds = array<i64: 1, 384>}, {pipeline_mode = #tpu.pipeline_mode<synchronous>, transform_indices = @transform_4, window_bounds = array<i64: 1, 384>}, {pipeline_mode = #tpu.pipeline_mode<synchronous>, transform_indices = @transform_5, window_bounds = array<i64: 384, 288>}, {pipeline_mode = #tpu.pipeline_mode<synchronous>, transform_indices = @transform_6, window_bounds = array<i64: 1, 48>}, {pipeline_mode = #tpu.pipeline_mode<synchronous>, transform_indices = @transform_7, window_bounds = array<i64: 1, 48>}, {pipeline_mode = #tpu.pipeline_mode<synchronous>, transform_indices = @transform_8, window_bounds = array<i64: 288, 48>}, {pipeline_mode = #tpu.pipeline_mode<synchronous>, transform_indices = @transform_9, window_bounds = array<i64: 48, 288>}, {pipeline_mode = #tpu.pipeline_mode<synchronous>, transform_indices = @transform_10, window_bounds = array<i64: 288, 192>}, {pipeline_mode = #tpu.pipeline_mode<synchronous>, transform_indices = @transform_11, window_bounds = array<i64: 48, 32>}, {pipeline_mode = #tpu.pipeline_mode<synchronous>, transform_indices = @transform_12, window_bounds = array<i64: 1, 32>}, {pipeline_mode = #tpu.pipeline_mode<synchronous>, transform_indices = @transform_13, window_bounds = array<i64: 1, 32>}, {pipeline_mode = #tpu.pipeline_mode<synchronous>, transform_indices = @transform_14, window_bounds = array<i64: 192, 32>}, {pipeline_mode = #tpu.pipeline_mode<synchronous>, transform_indices = @transform_15, window_bounds = array<i64: 32, 192>}, {pipeline_mode = #tpu.pipeline_mode<synchronous>, transform_indices = @transform_16, window_bounds = array<i64: 256, 256>}, {pipeline_mode = #tpu.pipeline_mode<synchronous>, transform_indices = @transform_17, window_bounds = array<i64: 1, 256>}, {pipeline_mode = #tpu.pipeline_mode<synchronous>, transform_indices = @transform_18, window_bounds = array<i64: 8, 256>}]} {
    %c0 = arith.constant 0 : index
    %c0_0 = arith.constant 0 : index
    %0 = vector.load %arg1[%c0, %c0_0] : memref<8x32xf32, #tpu.memory_space<vmem>>, vector<8x32xf32>
    %c0_1 = arith.constant 0 : index
    %c0_2 = arith.constant 0 : index
    %1 = vector.load %arg2[%c0_1, %c0_2] : memref<32x384xf32, #tpu.memory_space<vmem>>, vector<32x384xf32>
    %cst = arith.constant dense<0.000000e+00> : vector<8x384xf32>
    %2 = tpu.matmul %0, %1, %cst {dimension_numbers = #tpu.dot_dimension_numbers<[1], [0], [0], [1], [0, 0, 1, 1], [], []>} : vector<8x32xf32>, vector<32x384xf32>, vector<8x384xf32> -> vector<8x384xf32>
    %c0_3 = arith.constant 0 : index
    %c0_4 = arith.constant 0 : index
    %3 = vector.load %arg3[%c0_3, %c0_4] : memref<1x384xf32, #tpu.memory_space<vmem>>, vector<1x384xf32>
    %4 = vector.broadcast %3 : vector<1x384xf32> to vector<8x384xf32>
    %5 = arith.addf %2, %4 : vector<8x384xf32>
    %cst_5 = arith.constant dense<0.000000e+00> : vector<384xf32>
    %6 = vector.multi_reduction <add>, %5, %cst_5 [0] : vector<8x384xf32> to vector<384xf32>
    %7 = vector.shape_cast %6 : vector<384xf32> to vector<1x384xf32>
    %cst_6 = arith.constant 8.000000e+00 : f32
    %8 = vector.broadcast %cst_6 : f32 to vector<1x384xf32>
    %9 = arith.divf %7, %8 : vector<1x384xf32>
    %10 = arith.mulf %5, %5 : vector<8x384xf32>
    %cst_7 = arith.constant dense<0.000000e+00> : vector<384xf32>
    %11 = vector.multi_reduction <add>, %10, %cst_7 [0] : vector<8x384xf32> to vector<384xf32>
    %12 = vector.shape_cast %11 : vector<384xf32> to vector<1x384xf32>
    %cst_8 = arith.constant 8.000000e+00 : f32
    %13 = vector.broadcast %cst_8 : f32 to vector<1x384xf32>
    %14 = arith.divf %12, %13 : vector<1x384xf32>
    %15 = arith.mulf %9, %9 : vector<1x384xf32>
    %16 = arith.subf %14, %15 : vector<1x384xf32>
    %cst_9 = arith.constant 0.000000e+00 : f32
    %17 = vector.broadcast %cst_9 : f32 to vector<1x384xf32>
    %18 = arith.maximumf %16, %17 : vector<1x384xf32>
    %19 = vector.broadcast %9 : vector<1x384xf32> to vector<8x384xf32>
    %20 = arith.subf %5, %19 : vector<8x384xf32>
    %cst_10 = arith.constant 9.99999974E-6 : f32
    %21 = vector.broadcast %cst_10 : f32 to vector<1x384xf32>
    %22 = arith.addf %18, %21 : vector<1x384xf32>
    %23 = math.rsqrt %22 : vector<1x384xf32>
    %24 = vector.broadcast %23 : vector<1x384xf32> to vector<8x384xf32>
    %25 = arith.mulf %20, %24 : vector<8x384xf32>
    %c0_11 = arith.constant 0 : index
    %c0_12 = arith.constant 0 : index
    %26 = vector.load %arg4[%c0_11, %c0_12] : memref<1x384xf32, #tpu.memory_space<vmem>>, vector<1x384xf32>
    %27 = vector.broadcast %26 : vector<1x384xf32> to vector<8x384xf32>
    %28 = arith.mulf %25, %27 : vector<8x384xf32>
    %c0_13 = arith.constant 0 : index
    %c0_14 = arith.constant 0 : index
    %29 = vector.load %arg5[%c0_13, %c0_14] : memref<1x384xf32, #tpu.memory_space<vmem>>, vector<1x384xf32>
    %30 = vector.broadcast %29 : vector<1x384xf32> to vector<8x384xf32>
    %31 = arith.addf %28, %30 : vector<8x384xf32>
    %cst_15 = arith.constant 0.000000e+00 : f32
    %32 = vector.broadcast %cst_15 : f32 to vector<8x384xf32>
    %33 = arith.maximumf %31, %32 : vector<8x384xf32>
    %c0_16 = arith.constant 0 : index
    %c0_17 = arith.constant 0 : index
    %34 = vector.load %arg6[%c0_16, %c0_17] : memref<384x288xf32, #tpu.memory_space<vmem>>, vector<384x288xf32>
    %cst_18 = arith.constant dense<0.000000e+00> : vector<8x288xf32>
    %35 = tpu.matmul %33, %34, %cst_18 {dimension_numbers = #tpu.dot_dimension_numbers<[1], [0], [0], [1], [0, 0, 1, 1], [], []>} : vector<8x384xf32>, vector<384x288xf32>, vector<8x288xf32> -> vector<8x288xf32>
    %cst_19 = arith.constant dense<0.000000e+00> : vector<288xf32>
    %36 = vector.multi_reduction <add>, %35, %cst_19 [0] : vector<8x288xf32> to vector<288xf32>
    %37 = vector.shape_cast %36 : vector<288xf32> to vector<1x288xf32>
    %38 = arith.mulf %35, %35 : vector<8x288xf32>
    %cst_20 = arith.constant dense<0.000000e+00> : vector<288xf32>
    %39 = vector.multi_reduction <add>, %38, %cst_20 [0] : vector<8x288xf32> to vector<288xf32>
    %40 = vector.shape_cast %39 : vector<288xf32> to vector<1x288xf32>
    %41 = tpu.concatenate %37, %40 in 0 : vector<1x288xf32>, vector<1x288xf32> -> vector<2x288xf32>
    %c0_21 = arith.constant 0 : index
    %c0_22 = arith.constant 0 : index
    %42 = vector.load %arg9[%c0_21, %c0_22] : memref<288x48xf32, #tpu.memory_space<vmem>>, vector<288x48xf32>
    %cst_23 = arith.constant dense<0.000000e+00> : vector<2x48xf32>
    %43 = tpu.matmul %41, %42, %cst_23 {dimension_numbers = #tpu.dot_dimension_numbers<[1], [0], [0], [1], [0, 0, 1, 1], [], []>} : vector<2x288xf32>, vector<288x48xf32>, vector<2x48xf32> -> vector<2x48xf32>
    %44 = vector.extract_strided_slice %43 {offsets = [0, 0], sizes = [1, 48], strides = [1, 1]} : vector<2x48xf32> to vector<1x48xf32>
    %cst_24 = arith.constant 3.120000e+02 : f32
    %45 = vector.broadcast %cst_24 : f32 to vector<1x48xf32>
    %46 = arith.divf %44, %45 : vector<1x48xf32>
    %47 = vector.extract_strided_slice %43 {offsets = [1, 0], sizes = [1, 48], strides = [1, 1]} : vector<2x48xf32> to vector<1x48xf32>
    %cst_25 = arith.constant 3.120000e+02 : f32
    %48 = vector.broadcast %cst_25 : f32 to vector<1x48xf32>
    %49 = arith.divf %47, %48 : vector<1x48xf32>
    %50 = arith.mulf %46, %46 : vector<1x48xf32>
    %51 = arith.subf %49, %50 : vector<1x48xf32>
    %cst_26 = arith.constant 0.000000e+00 : f32
    %52 = vector.broadcast %cst_26 : f32 to vector<1x48xf32>
    %53 = arith.maximumf %51, %52 : vector<1x48xf32>
    %c0_27 = arith.constant 0 : index
    %c0_28 = arith.constant 0 : index
    %54 = vector.load %arg7[%c0_27, %c0_28] : memref<1x48xf32, #tpu.memory_space<vmem>>, vector<1x48xf32>
    %cst_29 = arith.constant 9.99999974E-6 : f32
    %55 = vector.broadcast %cst_29 : f32 to vector<1x48xf32>
    %56 = arith.addf %53, %55 : vector<1x48xf32>
    %57 = math.rsqrt %56 : vector<1x48xf32>
    %58 = arith.mulf %54, %57 : vector<1x48xf32>
    %c0_30 = arith.constant 0 : index
    %c0_31 = arith.constant 0 : index
    %59 = vector.load %arg8[%c0_30, %c0_31] : memref<1x48xf32, #tpu.memory_space<vmem>>, vector<1x48xf32>
    %60 = arith.mulf %46, %58 : vector<1x48xf32>
    %61 = arith.subf %59, %60 : vector<1x48xf32>
    %62 = tpu.concatenate %58, %61 in 0 : vector<1x48xf32>, vector<1x48xf32> -> vector<2x48xf32>
    %c0_32 = arith.constant 0 : index
    %c0_33 = arith.constant 0 : index
    %63 = vector.load %arg10[%c0_32, %c0_33] : memref<48x288xf32, #tpu.memory_space<vmem>>, vector<48x288xf32>
    %cst_34 = arith.constant dense<0.000000e+00> : vector<2x288xf32>
    %64 = tpu.matmul %62, %63, %cst_34 {dimension_numbers = #tpu.dot_dimension_numbers<[1], [0], [0], [1], [0, 0, 1, 1], [], []>} : vector<2x48xf32>, vector<48x288xf32>, vector<2x288xf32> -> vector<2x288xf32>
    %65 = vector.extract_strided_slice %64 {offsets = [0, 0], sizes = [1, 288], strides = [1, 1]} : vector<2x288xf32> to vector<1x288xf32>
    %66 = vector.broadcast %65 : vector<1x288xf32> to vector<8x288xf32>
    %67 = arith.mulf %35, %66 : vector<8x288xf32>
    %68 = vector.extract_strided_slice %64 {offsets = [1, 0], sizes = [1, 288], strides = [1, 1]} : vector<2x288xf32> to vector<1x288xf32>
    %69 = vector.broadcast %68 : vector<1x288xf32> to vector<8x288xf32>
    %70 = arith.addf %67, %69 : vector<8x288xf32>
    %cst_35 = arith.constant 0.000000e+00 : f32
    %71 = vector.broadcast %cst_35 : f32 to vector<8x288xf32>
    %72 = arith.maximumf %70, %71 : vector<8x288xf32>
    %cst_36 = arith.constant 0.000000e+00 : f32
    %73 = vector.broadcast %cst_36 : f32 to vector<1x48xf32>
    %74 = arith.maximumf %61, %73 : vector<1x48xf32>
    %c0_37 = arith.constant 0 : index
    %c0_38 = arith.constant 0 : index
    %75 = vector.load %arg11[%c0_37, %c0_38] : memref<288x192xf32, #tpu.memory_space<vmem>>, vector<288x192xf32>
    %cst_39 = arith.constant dense<0.000000e+00> : vector<8x192xf32>
    %76 = tpu.matmul %72, %75, %cst_39 {dimension_numbers = #tpu.dot_dimension_numbers<[1], [0], [0], [1], [0, 0, 1, 1], [], []>} : vector<8x288xf32>, vector<288x192xf32>, vector<8x192xf32> -> vector<8x192xf32>
    %c0_40 = arith.constant 0 : index
    %c0_41 = arith.constant 0 : index
    %77 = vector.load %arg12[%c0_40, %c0_41] : memref<48x32xf32, #tpu.memory_space<vmem>>, vector<48x32xf32>
    %cst_42 = arith.constant dense<0.000000e+00> : vector<1x32xf32>
    %78 = tpu.matmul %74, %77, %cst_42 {dimension_numbers = #tpu.dot_dimension_numbers<[1], [0], [0], [1], [0, 0, 1, 1], [], []>} : vector<1x48xf32>, vector<48x32xf32>, vector<1x32xf32> -> vector<1x32xf32>
    %cst_43 = arith.constant dense<0.000000e+00> : vector<192xf32>
    %79 = vector.multi_reduction <add>, %76, %cst_43 [0] : vector<8x192xf32> to vector<192xf32>
    %80 = vector.shape_cast %79 : vector<192xf32> to vector<1x192xf32>
    %81 = arith.mulf %76, %76 : vector<8x192xf32>
    %cst_44 = arith.constant dense<0.000000e+00> : vector<192xf32>
    %82 = vector.multi_reduction <add>, %81, %cst_44 [0] : vector<8x192xf32> to vector<192xf32>
    %83 = vector.shape_cast %82 : vector<192xf32> to vector<1x192xf32>
    %84 = tpu.concatenate %80, %83 in 0 : vector<1x192xf32>, vector<1x192xf32> -> vector<2x192xf32>
    %c0_45 = arith.constant 0 : index
    %c0_46 = arith.constant 0 : index
    %85 = vector.load %arg15[%c0_45, %c0_46] : memref<192x32xf32, #tpu.memory_space<vmem>>, vector<192x32xf32>
    %cst_47 = arith.constant dense<0.000000e+00> : vector<2x32xf32>
    %86 = tpu.matmul %84, %85, %cst_47 {dimension_numbers = #tpu.dot_dimension_numbers<[1], [0], [0], [1], [0, 0, 1, 1], [], []>} : vector<2x192xf32>, vector<192x32xf32>, vector<2x32xf32> -> vector<2x32xf32>
    %87 = vector.extract_strided_slice %86 {offsets = [0, 0], sizes = [1, 32], strides = [1, 1]} : vector<2x32xf32> to vector<1x32xf32>
    %cst_48 = arith.constant 4.000000e+01 : f32
    %88 = vector.broadcast %cst_48 : f32 to vector<1x32xf32>
    %89 = arith.mulf %88, %78 : vector<1x32xf32>
    %90 = arith.addf %87, %89 : vector<1x32xf32>
    %91 = vector.extract_strided_slice %86 {offsets = [1, 0], sizes = [1, 32], strides = [1, 1]} : vector<2x32xf32> to vector<1x32xf32>
    %cst_49 = arith.constant 4.000000e+01 : f32
    %92 = vector.broadcast %cst_49 : f32 to vector<1x32xf32>
    %93 = arith.mulf %92, %78 : vector<1x32xf32>
    %94 = arith.mulf %93, %78 : vector<1x32xf32>
    %95 = arith.addf %91, %94 : vector<1x32xf32>
    %cst_50 = arith.constant 5.520000e+02 : f32
    %96 = vector.broadcast %cst_50 : f32 to vector<1x32xf32>
    %97 = arith.divf %90, %96 : vector<1x32xf32>
    %cst_51 = arith.constant 5.520000e+02 : f32
    %98 = vector.broadcast %cst_51 : f32 to vector<1x32xf32>
    %99 = arith.divf %95, %98 : vector<1x32xf32>
    %100 = arith.mulf %97, %97 : vector<1x32xf32>
    %101 = arith.subf %99, %100 : vector<1x32xf32>
    %cst_52 = arith.constant 0.000000e+00 : f32
    %102 = vector.broadcast %cst_52 : f32 to vector<1x32xf32>
    %103 = arith.maximumf %101, %102 : vector<1x32xf32>
    %c0_53 = arith.constant 0 : index
    %c0_54 = arith.constant 0 : index
    %104 = vector.load %arg13[%c0_53, %c0_54] : memref<1x32xf32, #tpu.memory_space<vmem>>, vector<1x32xf32>
    %cst_55 = arith.constant 9.99999974E-6 : f32
    %105 = vector.broadcast %cst_55 : f32 to vector<1x32xf32>
    %106 = arith.addf %103, %105 : vector<1x32xf32>
    %107 = math.rsqrt %106 : vector<1x32xf32>
    %108 = arith.mulf %104, %107 : vector<1x32xf32>
    %c0_56 = arith.constant 0 : index
    %c0_57 = arith.constant 0 : index
    %109 = vector.load %arg14[%c0_56, %c0_57] : memref<1x32xf32, #tpu.memory_space<vmem>>, vector<1x32xf32>
    %110 = arith.mulf %97, %108 : vector<1x32xf32>
    %111 = arith.subf %109, %110 : vector<1x32xf32>
    %112 = tpu.concatenate %108, %111 in 0 : vector<1x32xf32>, vector<1x32xf32> -> vector<2x32xf32>
    %c0_58 = arith.constant 0 : index
    %c0_59 = arith.constant 0 : index
    %113 = vector.load %arg16[%c0_58, %c0_59] : memref<32x192xf32, #tpu.memory_space<vmem>>, vector<32x192xf32>
    %cst_60 = arith.constant dense<0.000000e+00> : vector<2x192xf32>
    %114 = tpu.matmul %112, %113, %cst_60 {dimension_numbers = #tpu.dot_dimension_numbers<[1], [0], [0], [1], [0, 0, 1, 1], [], []>} : vector<2x32xf32>, vector<32x192xf32>, vector<2x192xf32> -> vector<2x192xf32>
    %115 = vector.extract_strided_slice %114 {offsets = [0, 0], sizes = [1, 192], strides = [1, 1]} : vector<2x192xf32> to vector<1x192xf32>
    %116 = vector.broadcast %115 : vector<1x192xf32> to vector<8x192xf32>
    %117 = arith.mulf %76, %116 : vector<8x192xf32>
    %118 = vector.extract_strided_slice %114 {offsets = [1, 0], sizes = [1, 192], strides = [1, 1]} : vector<2x192xf32> to vector<1x192xf32>
    %119 = vector.broadcast %118 : vector<1x192xf32> to vector<8x192xf32>
    %120 = arith.addf %117, %119 : vector<8x192xf32>
    %cst_61 = arith.constant 0.000000e+00 : f32
    %121 = vector.broadcast %cst_61 : f32 to vector<8x192xf32>
    %122 = arith.maximumf %120, %121 : vector<8x192xf32>
    %123 = arith.mulf %78, %108 : vector<1x32xf32>
    %124 = arith.addf %123, %111 : vector<1x32xf32>
    %cst_62 = arith.constant 0.000000e+00 : f32
    %125 = vector.broadcast %cst_62 : f32 to vector<1x32xf32>
    %126 = arith.maximumf %124, %125 : vector<1x32xf32>
    %cst_63 = arith.constant 0.000000e+00 : f32
    %127 = vector.broadcast %cst_63 : f32 to vector<1x32xf32>
    %128 = arith.maximumf %111, %127 : vector<1x32xf32>
    %c0_64 = arith.constant 0 : index
    %c0_65 = arith.constant 0 : index
    %129 = vector.load %arg20[%c0_64, %c0_65] : memref<8x256xf32, #tpu.memory_space<vmem>>, vector<8x192xf32>
    tpu.vector_store %arg20[%c0_64, %c0_65], %122 {strides = array<i32>} : memref<8x256xf32, #tpu.memory_space<vmem>>, vector<8x192xf32>,
    %130 = vector.shape_cast %126 : vector<1x32xf32> to vector<1x32xf32>
    %131 = vector.broadcast %130 : vector<1x32xf32> to vector<8x32xf32>
    %c0_66 = arith.constant 0 : index
    %c192 = arith.constant 192 : index
    %132 = vector.load %arg20[%c0_66, %c192] : memref<8x256xf32, #tpu.memory_space<vmem>>, vector<8x32xf32>
    tpu.vector_store %arg20[%c0_66, %c192], %131 {strides = array<i32>} : memref<8x256xf32, #tpu.memory_space<vmem>>, vector<8x32xf32>,
    %133 = vector.shape_cast %128 : vector<1x32xf32> to vector<1x32xf32>
    %134 = vector.broadcast %133 : vector<1x32xf32> to vector<8x32xf32>
    %c0_67 = arith.constant 0 : index
    %c224 = arith.constant 224 : index
    %135 = vector.load %arg20[%c0_67, %c224] : memref<8x256xf32, #tpu.memory_space<vmem>>, vector<8x32xf32>
    tpu.vector_store %arg20[%c0_67, %c224], %134 {strides = array<i32>} : memref<8x256xf32, #tpu.memory_space<vmem>>, vector<8x32xf32>,
    %c0_68 = arith.constant 0 : index
    %c0_69 = arith.constant 0 : index
    %136 = vector.load %arg20[%c0_68, %c0_69] : memref<8x256xf32, #tpu.memory_space<vmem>>, vector<8x256xf32>
    %c0_70 = arith.constant 0 : index
    %c0_71 = arith.constant 0 : index
    %137 = vector.load %arg17[%c0_70, %c0_71] : memref<256x256xf32, #tpu.memory_space<vmem>>, vector<256x256xf32>
    %cst_72 = arith.constant dense<0.000000e+00> : vector<8x256xf32>
    %138 = tpu.matmul %136, %137, %cst_72 {dimension_numbers = #tpu.dot_dimension_numbers<[1], [0], [0], [1], [0, 0, 1, 1], [], []>} : vector<8x256xf32>, vector<256x256xf32>, vector<8x256xf32> -> vector<8x256xf32>
    %c0_73 = arith.constant 0 : index
    %c0_74 = arith.constant 0 : index
    %139 = vector.load %arg18[%c0_73, %c0_74] : memref<1x256xf32, #tpu.memory_space<vmem>>, vector<1x256xf32>
    %140 = vector.broadcast %139 : vector<1x256xf32> to vector<8x256xf32>
    %141 = arith.addf %138, %140 : vector<8x256xf32>
    %142 = math.tanh %141 : vector<8x256xf32>
    %c0_75 = arith.constant 0 : index
    %c0_76 = arith.constant 0 : index
    %143 = vector.load %arg19[%c0_75, %c0_76] : memref<8x256xf32, #tpu.memory_space<vmem>>, vector<8x256xf32>
    tpu.vector_store %arg19[%c0_75, %c0_76], %142 {strides = array<i32>} : memref<8x256xf32, #tpu.memory_space<vmem>>, vector<8x256xf32>,
    return
  }
  func.func @transform_0(%arg0: i32) -> (i32, i32) {
    %c0_i32 = arith.constant 0 : i32
    %c0_i32_0 = arith.constant 0 : i32
    %c0_i32_1 = arith.constant 0 : i32
    return %c0_i32, %c0_i32_0 : i32, i32
  }
  func.func @transform_1(%arg0: i32) -> (i32, i32) {
    %c0_i32 = arith.constant 0 : i32
    %c0_i32_0 = arith.constant 0 : i32
    %c0_i32_1 = arith.constant 0 : i32
    return %c0_i32, %c0_i32_0 : i32, i32
  }
  func.func @transform_2(%arg0: i32) -> (i32, i32) {
    %c0_i32 = arith.constant 0 : i32
    %c0_i32_0 = arith.constant 0 : i32
    %c0_i32_1 = arith.constant 0 : i32
    return %c0_i32, %c0_i32_0 : i32, i32
  }
  func.func @transform_3(%arg0: i32) -> (i32, i32) {
    %c0_i32 = arith.constant 0 : i32
    %c0_i32_0 = arith.constant 0 : i32
    %c0_i32_1 = arith.constant 0 : i32
    return %c0_i32, %c0_i32_0 : i32, i32
  }
  func.func @transform_4(%arg0: i32) -> (i32, i32) {
    %c0_i32 = arith.constant 0 : i32
    %c0_i32_0 = arith.constant 0 : i32
    %c0_i32_1 = arith.constant 0 : i32
    return %c0_i32, %c0_i32_0 : i32, i32
  }
  func.func @transform_5(%arg0: i32) -> (i32, i32) {
    %c0_i32 = arith.constant 0 : i32
    %c0_i32_0 = arith.constant 0 : i32
    %c0_i32_1 = arith.constant 0 : i32
    return %c0_i32, %c0_i32_0 : i32, i32
  }
  func.func @transform_6(%arg0: i32) -> (i32, i32) {
    %c0_i32 = arith.constant 0 : i32
    %c0_i32_0 = arith.constant 0 : i32
    %c0_i32_1 = arith.constant 0 : i32
    return %c0_i32, %c0_i32_0 : i32, i32
  }
  func.func @transform_7(%arg0: i32) -> (i32, i32) {
    %c0_i32 = arith.constant 0 : i32
    %c0_i32_0 = arith.constant 0 : i32
    %c0_i32_1 = arith.constant 0 : i32
    return %c0_i32, %c0_i32_0 : i32, i32
  }
  func.func @transform_8(%arg0: i32) -> (i32, i32) {
    %c0_i32 = arith.constant 0 : i32
    %c0_i32_0 = arith.constant 0 : i32
    %c0_i32_1 = arith.constant 0 : i32
    return %c0_i32, %c0_i32_0 : i32, i32
  }
  func.func @transform_9(%arg0: i32) -> (i32, i32) {
    %c0_i32 = arith.constant 0 : i32
    %c0_i32_0 = arith.constant 0 : i32
    %c0_i32_1 = arith.constant 0 : i32
    return %c0_i32, %c0_i32_0 : i32, i32
  }
  func.func @transform_10(%arg0: i32) -> (i32, i32) {
    %c0_i32 = arith.constant 0 : i32
    %c0_i32_0 = arith.constant 0 : i32
    %c0_i32_1 = arith.constant 0 : i32
    return %c0_i32, %c0_i32_0 : i32, i32
  }
  func.func @transform_11(%arg0: i32) -> (i32, i32) {
    %c0_i32 = arith.constant 0 : i32
    %c0_i32_0 = arith.constant 0 : i32
    %c0_i32_1 = arith.constant 0 : i32
    return %c0_i32, %c0_i32_0 : i32, i32
  }
  func.func @transform_12(%arg0: i32) -> (i32, i32) {
    %c0_i32 = arith.constant 0 : i32
    %c0_i32_0 = arith.constant 0 : i32
    %c0_i32_1 = arith.constant 0 : i32
    return %c0_i32, %c0_i32_0 : i32, i32
  }
  func.func @transform_13(%arg0: i32) -> (i32, i32) {
    %c0_i32 = arith.constant 0 : i32
    %c0_i32_0 = arith.constant 0 : i32
    %c0_i32_1 = arith.constant 0 : i32
    return %c0_i32, %c0_i32_0 : i32, i32
  }
  func.func @transform_14(%arg0: i32) -> (i32, i32) {
    %c0_i32 = arith.constant 0 : i32
    %c0_i32_0 = arith.constant 0 : i32
    %c0_i32_1 = arith.constant 0 : i32
    return %c0_i32, %c0_i32_0 : i32, i32
  }
  func.func @transform_15(%arg0: i32) -> (i32, i32) {
    %c0_i32 = arith.constant 0 : i32
    %c0_i32_0 = arith.constant 0 : i32
    %c0_i32_1 = arith.constant 0 : i32
    return %c0_i32, %c0_i32_0 : i32, i32
  }
  func.func @transform_16(%arg0: i32) -> (i32, i32) {
    %c0_i32 = arith.constant 0 : i32
    %c0_i32_0 = arith.constant 0 : i32
    %c0_i32_1 = arith.constant 0 : i32
    return %c0_i32, %c0_i32_0 : i32, i32
  }
  func.func @transform_17(%arg0: i32) -> (i32, i32) {
    %c0_i32 = arith.constant 0 : i32
    %c0_i32_0 = arith.constant 0 : i32
    %c0_i32_1 = arith.constant 0 : i32
    return %c0_i32, %c0_i32_0 : i32, i32
  }
  func.func @transform_18(%arg0: i32) -> (i32, i32) {
    %c0_i32 = arith.constant 0 : i32
    %c0_i32_0 = arith.constant 0 : i32
    %c0_i32_1 = arith.constant 0 : i32
    return %c0_i32, %c0_i32_0 : i32, i32
  }
}

</mosaic_0001>

<llo_original>
// kernel: generator_forward.1
$region0: #{generator_forward.1}
  #allocation0 [shape = 'u32[]', space=smem, size = 0x4, offset = 0x4, fixed_abs, tag = 'smem constant byte address 0x4 - core index']
  #allocation1 [shape = 'u32[144,128]{1,0:T(1,128)}', space=vmem, size = 0x12000, scoped, tag = 'internal scratch']
  #allocation2 [shape = 'f32[8,256]{1,0:T(8,128)}', space=vmem, size = 0x2000, scoped, tag = 'scratch operand']
  %s0 = inlined_call_operand.vmem [shape: f32[8,32], index: 0, kind: input, shape index: {}]
  %s1 = inlined_call_operand.vmem [shape: f32[32,384], index: 1, kind: input, shape index: {}]
  %s2 = inlined_call_operand.vmem [shape: f32[1,384], index: 2, kind: input, shape index: {}]
  %s3 = inlined_call_operand.vmem [shape: f32[1,384], index: 3, kind: input, shape index: {}]
  %s4 = inlined_call_operand.vmem [shape: f32[1,384], index: 4, kind: input, shape index: {}]
  %s5 = inlined_call_operand.vmem [shape: f32[384,288], index: 5, kind: input, shape index: {}]
  %s6 = inlined_call_operand.vmem [shape: f32[1,48], index: 6, kind: input, shape index: {}]
  %s7 = inlined_call_operand.vmem [shape: f32[1,48], index: 7, kind: input, shape index: {}]
  %s8 = inlined_call_operand.vmem [shape: f32[288,48], index: 8, kind: input, shape index: {}]
  %s9 = inlined_call_operand.vmem [shape: f32[48,288], index: 9, kind: input, shape index: {}]
  %s10 = inlined_call_operand.vmem [shape: f32[288,192], index: 10, kind: input, shape index: {}]
  %s11 = inlined_call_operand.vmem [shape: f32[48,32], index: 11, kind: input, shape index: {}]
  %s12 = inlined_call_operand.vmem [shape: f32[1,32], index: 12, kind: input, shape index: {}]
  %s13 = inlined_call_operand.vmem [shape: f32[1,32], index: 13, kind: input, shape index: {}]
  %s14 = inlined_call_operand.vmem [shape: f32[192,32], index: 14, kind: input, shape index: {}]
  %s15 = inlined_call_operand.vmem [shape: f32[32,192], index: 15, kind: input, shape index: {}]
  %s16 = inlined_call_operand.vmem [shape: f32[256,256], index: 16, kind: input, shape index: {}]
  %s17 = inlined_call_operand.vmem [shape: f32[1,256], index: 17, kind: input, shape index: {}]
  %s18 = inlined_call_operand.vmem [shape: f32[8,256], index: 18, kind: output, shape index: {}]
  %s19 = sld [smem:[#allocation0]]
  $region82: #{generator_forward.1} parent=0
    _
  %s21 = ssub.s32 1, %s19
  %s22 = scalar_select 0, %s21, %s19
  // Predicated region
  $region2: #{generator_forward.1} parent=0 // pred_check
    _
  $region3: #{generator_forward.1} parent=0 // pred_check_branch
    %24 = sbr.rel (0) target = $region5
  $region4: #{generator_forward.1} parent=0 // pred_region
    _
  $region5: #{generator_forward.1} parent=0 // pred_fallthru
    _
  // Predicated region
  $region6: #{generator_forward.1} parent=0 // pred_check
    _
  $region7: #{generator_forward.1} parent=0 // pred_check_branch
    %26 = sbr.rel (0) target = $region9
  $region8: #{generator_forward.1} parent=0 // pred_region
    _
  $region9: #{generator_forward.1} parent=0 // pred_fallthru
    _
  // Predicated region
  $region10: #{generator_forward.1} parent=0 // pred_check
    _
  $region11: #{generator_forward.1} parent=0 // pred_check_branch
    %28 = sbr.rel (0) target = $region13
  $region12: #{generator_forward.1} parent=0 // pred_region
    _
  $region13: #{generator_forward.1} parent=0 // pred_fallthru
    _
  // Predicated region
  $region14: #{generator_forward.1} parent=0 // pred_check
    _
  $region15: #{generator_forward.1} parent=0 // pred_check_branch
    %30 = sbr.rel (0) target = $region17
  $region16: #{generator_forward.1} parent=0 // pred_region
    _
  $region17: #{generator_forward.1} parent=0 // pred_fallthru
    _
  // Predicated region
  $region18: #{generator_forward.1} parent=0 // pred_check
    _
  $region19: #{generator_forward.1} parent=0 // pred_check_branch
    %32 = sbr.rel (0) target = $region21
  $region20: #{generator_forward.1} parent=0 // pred_region
    _
  $region21: #{generator_forward.1} parent=0 // pred_fallthru
    _
  // Predicated region
  $region22: #{generator_forward.1} parent=0 // pred_check
    _
  $region23: #{generator_forward.1} parent=0 // pred_check_branch
    %34 = sbr.rel (0) target = $region25
  $region24: #{generator_forward.1} parent=0 // pred_region
    _
  $region25: #{generator_forward.1} parent=0 // pred_fallthru
    _
  // Predicated region
  $region26: #{generator_forward.1} parent=0 // pred_check
    _
  $region27: #{generator_forward.1} parent=0 // pred_check_branch
    %36 = sbr.rel (0) target = $region29
  $region28: #{generator_forward.1} parent=0 // pred_region
    _
  $region29: #{generator_forward.1} parent=0 // pred_fallthru
    _
  // Predicated region
  $region30: #{generator_forward.1} parent=0 // pred_check
    _
  $region31: #{generator_forward.1} parent=0 // pred_check_branch
    %38 = sbr.rel (0) target = $region33
  $region32: #{generator_forward.1} parent=0 // pred_region
    _
  $region33: #{generator_forward.1} parent=0 // pred_fallthru
    _
  // Predicated region
  $region34: #{generator_forward.1} parent=0 // pred_check
    _
  $region35: #{generator_forward.1} parent=0 // pred_check_branch
    %40 = sbr.rel (0) target = $region37
  $region36: #{generator_forward.1} parent=0 // pred_region
    _
  $region37: #{generator_forward.1} parent=0 // pred_fallthru
    _
  // Predicated region
  $region38: #{generator_forward.1} parent=0 // pred_check
    _
  $region39: #{generator_forward.1} parent=0 // pred_check_branch
    %42 = sbr.rel (0) target = $region41
  $region40: #{generator_forward.1} parent=0 // pred_region
    _
  $region41: #{generator_forward.1} parent=0 // pred_fallthru
    _
  // Predicated region
  $region42: #{generator_forward.1} parent=0 // pred_check
    _
  $region43: #{generator_forward.1} parent=0 // pred_check_branch
    %44 = sbr.rel (0) target = $region45
  $region44: #{generator_forward.1} parent=0 // pred_region
    _
  $region45: #{generator_forward.1} parent=0 // pred_fallthru
    _
  // Predicated region
  $region46: #{generator_forward.1} parent=0 // pred_check
    _
  $region47: #{generator_forward.1} parent=0 // pred_check_branch
    %46 = sbr.rel (0) target = $region49
  $region48: #{generator_forward.1} parent=0 // pred_region
    _
  $region49: #{generator_forward.1} parent=0 // pred_fallthru
    _
  // Predicated region
  $region50: #{generator_forward.1} parent=0 // pred_check
    _
  $region51: #{generator_forward.1} parent=0 // pred_check_branch
    %48 = sbr.rel (0) target = $region53
  $region52: #{generator_forward.1} parent=0 // pred_region
    _
  $region53: #{generator_forward.1} parent=0 // pred_fallthru
    _
  // Predicated region
  $region54: #{generator_forward.1} parent=0 // pred_check
    _
  $region55: #{generator_forward.1} parent=0 // pred_check_branch
    %50 = sbr.rel (0) target = $region57
  $region56: #{generator_forward.1} parent=0 // pred_region
    _
  $region57: #{generator_forward.1} parent=0 // pred_fallthru
    _
  // Predicated region
  $region58: #{generator_forward.1} parent=0 // pred_check
    _
  $region59: #{generator_forward.1} parent=0 // pred_check_branch
    %52 = sbr.rel (0) target = $region61
  $region60: #{generator_forward.1} parent=0 // pred_region
    _
  $region61: #{generator_forward.1} parent=0 // pred_fallthru
    _
  // Predicated region
  $region62: #{generator_forward.1} parent=0 // pred_check
    _
  $region63: #{generator_forward.1} parent=0 // pred_check_branch
    %54 = sbr.rel (0) target = $region65
  $region64: #{generator_forward.1} parent=0 // pred_region
    _
  $region65: #{generator_forward.1} parent=0 // pred_fallthru
    _
  // Predicated region
  $region66: #{generator_forward.1} parent=0 // pred_check
    _
  $region67: #{generator_forward.1} parent=0 // pred_check_branch
    %56 = sbr.rel (0) target = $region69
  $region68: #{generator_forward.1} parent=0 // pred_region
    _
  $region69: #{generator_forward.1} parent=0 // pred_fallthru
    _
  // Predicated region
  $region70: #{generator_forward.1} parent=0 // pred_check
    _
  $region71: #{generator_forward.1} parent=0 // pred_check_branch
    %58 = sbr.rel (0) target = $region73
  $region72: #{generator_forward.1} parent=0 // pred_region
    _
  $region73: #{generator_forward.1} parent=0 // pred_fallthru
    _
  %v59 = vld [vmem:[%s0] sm:$0xff]
  %v60 = vld [vmem:[%s1] sm:$0xff]
  %v61 = vld [vmem:[%s1 + $0x8] sm:$0xff]
  %v62 = vld [vmem:[%s1 + $0x10] sm:$0xff]
  %v63 = vld [vmem:[%s1 + $0x18] sm:$0xff]
  %v64 = vld [vmem:[%s1 + $0x20] sm:$0xff]
  %v65 = vld [vmem:[%s1 + $0x28] sm:$0xff]
  %v66 = vld [vmem:[%s1 + $0x30] sm:$0xff]
  %v67 = vld [vmem:[%s1 + $0x38] sm:$0xff]
  %v68 = vld [vmem:[%s1 + $0x40] sm:$0xff]
  %v69 = vld [vmem:[%s1 + $0x48] sm:$0xff]
  %v70 = vld [vmem:[%s1 + $0x50] sm:$0xff]
  %v71 = vld [vmem:[%s1 + $0x58] sm:$0xff]
  %v72 = vld [vmem:[%s2] sm:$0x7]
  %v74 = vlaneseq
  %v75 = vshrl.u32 %v74, 7
  %v76 = vsub.s32 0, %v75
  %v77 = vrot.slane %v72, %v76
  %v78 = vlaneseq
  %v79 = vshrl.u32 %v78, 7
  %v80 = vsub.s32 1, %v79
  %v81 = vrot.slane %v72, %v80
  %v82 = vlaneseq
  %v83 = vshrl.u32 %v82, 7
  %v84 = vsub.s32 2, %v83
  %v85 = vrot.slane %v72, %v84
  %vm89 = vcmask 261120
  %v91 = vsel %vm89, %v59, 0
  %93 = vmatprep.subr.mxu0 %v61
  %94 = vmatpush1.msra.mxu0 %v60
  %95 = vmatprep.subr.mxu0 %v64
  %96 = vmatpush1.msra.mxu0 %v63
  %97 = vmatprep.subr.mxu0 %v67
  %98 = vmatpush1.msra.mxu0 %v66
  %99 = vmatprep.subr.mxu0 %v70
  %100 = vmatpush1.msra.mxu0 %v69
  %101 = vmatprep.subr.mxu0 0.0
  %102 = vmatpush1.msra.mxu0 0.0
  %103 = vmatprep.subr.mxu0 0.0
  %104 = vmatpush1.msra.mxu0 0.0
  %105 = vmatprep.subr.mxu0 0.0
  %106 = vmatpush1.msra.mxu0 0.0
  %107 = vmatprep.subr.mxu0 0.0
  %108 = vmatpush1.msra.mxu0 0.0
  %109 = vmatprep.subr.mxu0 0.0
  %110 = vmatpush1.msra.mxu0 0.0
  %111 = vmatprep.subr.mxu0 0.0
  %112 = vmatpush1.msra.mxu0 0.0
  %113 = vmatprep.subr.mxu0 0.0
  %114 = vmatpush1.msra.mxu0 0.0
  %115 = vmatprep.subr.mxu0 0.0
  %116 = vmatpush1.msra.mxu0 0.0
  %117 = vmatprep.subr.mxu0 0.0
  %118 = vmatpush1.msra.mxu0 0.0
  %119 = vmatprep.subr.mxu0 0.0
  %120 = vmatpush1.msra.mxu0 0.0
  %121 = vmatprep.subr.mxu0 0.0
  %122 = vmatpush1.msra.mxu0 0.0
  %123 = vmatprep.subr.mxu0 0.0
  %124 = vmatpush1.msra.mxu0 0.0
  %125 = vmatprep.subr.mxu0 0.0
  %126 = vmatpush1.msra.mxu0 0.0
  %127 = vmatprep.subr.mxu0 0.0
  %128 = vmatpush1.msra.mxu0 0.0
  %129 = vmatprep.subr.mxu0 0.0
  %130 = vmatpush1.msra.mxu0 0.0
  %131 = vmatprep.subr.mxu0 0.0
  %132 = vmatpush1.msra.mxu0 0.0
  %133 = vmatprep.subr.mxu0 0.0
  %134 = vmatpush1.msra.mxu0 0.0
  %135 = vmatprep.subr.mxu0 0.0
  %136 = vmatpush1.msra.mxu0 0.0
  %137 = vmatprep.subr.mxu0 0.0
  %138 = vmatpush1.msra.mxu0 0.0
  %139 = vmatprep.subr.mxu0 0.0
  %140 = vmatpush1.msra.mxu0 0.0
  %141 = vmatprep.subr.mxu0 0.0
  %142 = vmatpush1.msra.mxu0 0.0
  %143 = vmatprep.subr.mxu0 0.0
  %144 = vmatpush1.msra.mxu0 0.0
  %145 = vmatprep.subr.mxu0 0.0
  %146 = vmatpush1.msra.mxu0 0.0
  %147 = vmatprep.subr.mxu0 0.0
  %148 = vmatpush1.msra.mxu0 0.0
  %149 = vmatprep.subr.mxu0 0.0
  %150 = vmatpush1.msra.mxu0 0.0
  %151 = vmatprep.subr.mxu0 0.0
  %152 = vmatpush1.msra.mxu0 0.0
  %153 = vmatprep.subr.mxu0 0.0
  %154 = vmatpush1.msra.mxu0 0.0
  %155 = vmatprep.subr.mxu0 0.0
  %156 = vmatpush1.msra.mxu0 0.0
  %157 = vmatprep.mubr.f32.mxu0 0.0
  %158 = vmatmul.mubr.f32.gmra.mrb[0].mxu0 %v91
  %v159 = vpop.f32.mrb[0].mxu0
  %v160 = vadd.f32 %v77, %v159
  %v161 = vpop.f32.mrb[0].mxu0
  %v162 = vadd.f32 %v81, %v161
  %163 = vdwg.mxu0
  %164 = vmatprep.subr.mxu0 0.0
  %165 = vmatpush1.msra.mxu0 %v62
  %166 = vmatprep.subr.mxu0 0.0
  %167 = vmatpush1.msra.mxu0 %v65
  %168 = vmatprep.subr.mxu0 0.0
  %169 = vmatpush1.msra.mxu0 %v68
  %170 = vmatprep.subr.mxu0 0.0
  %171 = vmatpush1.msra.mxu0 %v71
  %172 = vmatprep.subr.mxu0 0.0
  %173 = vmatpush1.msra.mxu0 0.0
  %174 = vmatprep.subr.mxu0 0.0
  %175 = vmatpush1.msra.mxu0 0.0
  %176 = vmatprep.subr.mxu0 0.0
  %177 = vmatpush1.msra.mxu0 0.0
  %178 = vmatprep.subr.mxu0 0.0
  %179 = vmatpush1.msra.mxu0 0.0
  %180 = vmatprep.subr.mxu0 0.0
  %181 = vmatpush1.msra.mxu0 0.0
  %182 = vmatprep.subr.mxu0 0.0
  %183 = vmatpush1.msra.mxu0 0.0
  %184 = vmatprep.subr.mxu0 0.0
  %185 = vmatpush1.msra.mxu0 0.0
  %186 = vmatprep.subr.mxu0 0.0
  %187 = vmatpush1.msra.mxu0 0.0
  %188 = vmatprep.subr.mxu0 0.0
  %189 = vmatpush1.msra.mxu0 0.0
  %190 = vmatprep.subr.mxu0 0.0
  %191 = vmatpush1.msra.mxu0 0.0
  %192 = vmatprep.subr.mxu0 0.0
  %193 = vmatpush1.msra.mxu0 0.0
  %194 = vmatprep.subr.mxu0 0.0
  %195 = vmatpush1.msra.mxu0 0.0
  %196 = vmatprep.subr.mxu0 0.0
  %197 = vmatpush1.msra.mxu0 0.0
  %198 = vmatprep.subr.mxu0 0.0
  %199 = vmatpush1.msra.mxu0 0.0
  %200 = vmatprep.subr.mxu0 0.0
  %201 = vmatpush1.msra.mxu0 0.0
  %202 = vmatprep.subr.mxu0 0.0
  %203 = vmatpush1.msra.mxu0 0.0
  %204 = vmatprep.subr.mxu0 0.0
  %205 = vmatpush1.msra.mxu0 0.0
  %206 = vmatprep.subr.mxu0 0.0
  %207 = vmatpush1.msra.mxu0 0.0
  %208 = vmatprep.subr.mxu0 0.0
  %209 = vmatpush1.msra.mxu0 0.0
  %210 = vmatprep.subr.mxu0 0.0
  %211 = vmatpush1.msra.mxu0 0.0
  %212 = vmatprep.subr.mxu0 0.0
  %213 = vmatpush1.msra.mxu0 0.0
  %214 = vmatprep.subr.mxu0 0.0
  %215 = vmatpush1.msra.mxu0 0.0
  %216 = vmatprep.subr.mxu0 0.0
  %217 = vmatpush1.msra.mxu0 0.0
  %218 = vmatprep.subr.mxu0 0.0
  %219 = vmatpush1.msra.mxu0 0.0
  %220 = vmatprep.subr.mxu0 0.0
  %221 = vmatpush1.msra.mxu0 0.0
  %222 = vmatprep.subr.mxu0 0.0
  %223 = vmatpush1.msra.mxu0 0.0
  %224 = vmatprep.subr.mxu0 0.0
  %225 = vmatpush1.msra.mxu0 0.0
  %226 = vmatprep.subr.mxu0 0.0
  %227 = vmatpush1.msra.mxu0 0.0
  %228 = vmatprep.mubr.f32.mxu0 0.0
  %229 = vmatmul.mubr.f32.gmra.mrb[0].mxu0 %v91
  %v230 = vpop.f32.mrb[0].mxu0
  %v231 = vadd.f32 %v85, %v230
  %v232 = vpop.f32.mrb[0].mxu0
  %233 = vdwg.mxu0
  %v234 = vrot.slane %v160, 4
  %v235 = vadd.f32 %v160, %v234
  %v236 = vrot.slane %v235, 2
  %v237 = vadd.f32 %v235, %v236
  %v238 = vrot.slane %v237, 1
  %v239 = vadd.f32 %v237, %v238
  %v240 = vrot.slane %v162, 4
  %v241 = vadd.f32 %v162, %v240
  %v242 = vrot.slane %v241, 2
  %v243 = vadd.f32 %v241, %v242
  %v244 = vrot.slane %v243, 1
  %v245 = vadd.f32 %v243, %v244
  %v246 = vrot.slane %v231, 4
  %v247 = vadd.f32 %v231, %v246
  %v248 = vrot.slane %v247, 2
  %v249 = vadd.f32 %v247, %v248
  %v250 = vrot.slane %v249, 1
  %v251 = vadd.f32 %v249, %v250
  %v252 = vrcp.pop 8.0
  %v253 = vmul.f32 %v239, %v252
  %v254 = vmul.f32 %v245, %v252
  %v255 = vmul.f32 %v251, %v252
  %v256 = vmul.f32 %v160, %v160
  %v257 = vmul.f32 %v162, %v162
  %v258 = vmul.f32 %v231, %v231
  %v259 = vrot.slane %v256, 4
  %v260 = vadd.f32 %v256, %v259
  %v261 = vrot.slane %v260, 2
  %v262 = vadd.f32 %v260, %v261
  %v263 = vrot.slane %v262, 1
  %v264 = vadd.f32 %v262, %v263
  %v265 = vrot.slane %v257, 4
  %v266 = vadd.f32 %v257, %v265
  %v267 = vrot.slane %v266, 2
  %v268 = vadd.f32 %v266, %v267
  %v269 = vrot.slane %v268, 1
  %v270 = vadd.f32 %v268, %v269
  %v271 = vrot.slane %v258, 4
  %v272 = vadd.f32 %v258, %v271
  %v273 = vrot.slane %v272, 2
  %v274 = vadd.f32 %v272, %v273
  %v275 = vrot.slane %v274, 1
  %v276 = vadd.f32 %v274, %v275
  %v277 = vmul.f32 %v264, %v252
  %v278 = vmul.f32 %v270, %v252
  %v279 = vmul.f32 %v276, %v252
  %v280 = vmul.f32 %v253, %v253
  %v281 = vmul.f32 %v254, %v254
  %v282 = vmul.f32 %v255, %v255
  %v283 = vsub.f32 %v277, %v280
  %v284 = vsub.f32 %v278, %v281
  %v285 = vsub.f32 %v279, %v282
  %v286 = vmax.f32 %v283, 0.0
  %v287 = vmax.f32 %v284, 0.0
  %v288 = vmax.f32 %v285, 0.0
  %v289 = vsub.f32 %v160, %v253
  %v290 = vsub.f32 %v162, %v254
  %v291 = vsub.f32 %v231, %v255
  %v292 = vadd.f32 %v286, 1e-05
  %v293 = vadd.f32 %v287, 1e-05
  %v294 = vadd.f32 %v288, 1e-05
  %v295 = vrsqrt.pop %v292
  %v296 = vrsqrt.pop %v293
  %v297 = vrsqrt.pop %v294
  %v298 = vmul.f32 %v289, %v295
  %v299 = vmul.f32 %v290, %v296
  %v300 = vmul.f32 %v291, %v297
  %v301 = vld [vmem:[%s3] sm:$0x7]
  %v303 = vlaneseq
  %v304 = vshrl.u32 %v303, 7
  %v305 = vsub.s32 0, %v304
  %v306 = vrot.slane %v301, %v305
  %v307 = vlaneseq
  %v308 = vshrl.u32 %v307, 7
  %v309 = vsub.s32 1, %v308
  %v310 = vrot.slane %v301, %v309
  %v311 = vlaneseq
  %v312 = vshrl.u32 %v311, 7
  %v313 = vsub.s32 2, %v312
  %v314 = vrot.slane %v301, %v313
  %v318 = vmul.f32 %v298, %v306
  %v319 = vmul.f32 %v299, %v310
  %v320 = vmul.f32 %v300, %v314
  %v321 = vld [vmem:[%s4] sm:$0x7]
  %v323 = vlaneseq
  %v324 = vshrl.u32 %v323, 7
  %v325 = vsub.s32 0, %v324
  %v326 = vrot.slane %v321, %v325
  %v327 = vlaneseq
  %v328 = vshrl.u32 %v327, 7
  %v329 = vsub.s32 1, %v328
  %v330 = vrot.slane %v321, %v329
  %v331 = vlaneseq
  %v332 = vshrl.u32 %v331, 7
  %v333 = vsub.s32 2, %v332
  %v334 = vrot.slane %v321, %v333
  %v338 = vadd.f32 %v318, %v326
  %v339 = vadd.f32 %v319, %v330
  %v340 = vadd.f32 %v320, %v334
  %v341 = vmax.f32 %v338, 0.0
  %v342 = vmax.f32 %v339, 0.0
  %v343 = vmax.f32 %v340, 0.0
  %v344 = vld [vmem:[%s5] sm:$0xff]
  %v345 = vld [vmem:[%s5 + $0x8] sm:$0xff]
  %v346 = vld [vmem:[%s5 + $0x10] sm:$0xff]
  %v347 = vld [vmem:[%s5 + $0x18] sm:$0xff]
  %v348 = vld [vmem:[%s5 + $0x20] sm:$0xff]
  %v349 = vld [vmem:[%s5 + $0x28] sm:$0xff]
  %v350 = vld [vmem:[%s5 + $0x30] sm:$0xff]
  %v351 = vld [vmem:[%s5 + $0x38] sm:$0xff]
  %v352 = vld [vmem:[%s5 + $0x40] sm:$0xff]
  %v353 = vld [vmem:[%s5 + $0x48] sm:$0xff]
  %v354 = vld [vmem:[%s5 + $0x50] sm:$0xff]
  %v355 = vld [vmem:[%s5 + $0x58] sm:$0xff]
  %v356 = vld [vmem:[%s5 + $0x60] sm:$0xff]
  %v357 = vld [vmem:[%s5 + $0x68] sm:$0xff]
  %v358 = vld [vmem:[%s5 + $0x70] sm:$0xff]
  %v359 = vld [vmem:[%s5 + $0x78] sm:$0xff]
  %v360 = vld [vmem:[%s5 + $0x80] sm:$0xff]
  %v361 = vld [vmem:[%s5 + $0x88] sm:$0xff]
  %v362 = vld [vmem:[%s5 + $0x90] sm:$0xff]
  %v363 = vld [vmem:[%s5 + $0x98] sm:$0xff]
  %v364 = vld [vmem:[%s5 + $0xa0] sm:$0xff]
  %v365 = vld [vmem:[%s5 + $0xa8] sm:$0xff]
  %v366 = vld [vmem:[%s5 + $0xb0] sm:$0xff]
  %v367 = vld [vmem:[%s5 + $0xb8] sm:$0xff]
  %v368 = vld [vmem:[%s5 + $0xc0] sm:$0xff]
  %v369 = vld [vmem:[%s5 + $0xc8] sm:$0xff]
  %v370 = vld [vmem:[%s5 + $0xd0] sm:$0xff]
  %v371 = vld [vmem:[%s5 + $0xd8] sm:$0xff]
  %v372 = vld [vmem:[%s5 + $0xe0] sm:$0xff]
  %v373 = vld [vmem:[%s5 + $0xe8] sm:$0xff]
  %v374 = vld [vmem:[%s5 + $0xf0] sm:$0xff]
  %v375 = vld [vmem:[%s5 + $0xf8] sm:$0xff]
  %v376 = vld [vmem:[%s5 + $0x100] sm:$0xff]
  %v377 = vld [vmem:[%s5 + $0x108] sm:$0xff]
  %v378 = vld [vmem:[%s5 + $0x110] sm:$0xff]
  %v379 = vld [vmem:[%s5 + $0x118] sm:$0xff]
  %v380 = vld [vmem:[%s5 + $0x120] sm:$0xff]
  %v381 = vld [vmem:[%s5 + $0x128] sm:$0xff]
  %v382 = vld [vmem:[%s5 + $0x130] sm:$0xff]
  %v383 = vld [vmem:[%s5 + $0x138] sm:$0xff]
  %v384 = vld [vmem:[%s5 + $0x140] sm:$0xff]
  %v385 = vld [vmem:[%s5 + $0x148] sm:$0xff]
  %v386 = vld [vmem:[%s5 + $0x150] sm:$0xff]
  %v387 = vld [vmem:[%s5 + $0x158] sm:$0xff]
  %v388 = vld [vmem:[%s5 + $0x160] sm:$0xff]
  %v389 = vld [vmem:[%s5 + $0x168] sm:$0xff]
  %v390 = vld [vmem:[%s5 + $0x170] sm:$0xff]
  %v391 = vld [vmem:[%s5 + $0x178] sm:$0xff]
  %v392 = vld [vmem:[%s5 + $0x180] sm:$0xff]
  %v393 = vld [vmem:[%s5 + $0x188] sm:$0xff]
  %v394 = vld [vmem:[%s5 + $0x190] sm:$0xff]
  %v395 = vld [vmem:[%s5 + $0x198] sm:$0xff]
  %v396 = vld [vmem:[%s5 + $0x1a0] sm:$0xff]
  %v397 = vld [vmem:[%s5 + $0x1a8] sm:$0xff]
  %v398 = vld [vmem:[%s5 + $0x1b0] sm:$0xff]
  %v399 = vld [vmem:[%s5 + $0x1b8] sm:$0xff]
  %v400 = vld [vmem:[%s5 + $0x1c0] sm:$0xff]
  %v401 = vld [vmem:[%s5 + $0x1c8] sm:$0xff]
  %v402 = vld [vmem:[%s5 + $0x1d0] sm:$0xff]
  %v403 = vld [vmem:[%s5 + $0x1d8] sm:$0xff]
  %v404 = vld [vmem:[%s5 + $0x1e0] sm:$0xff]
  %v405 = vld [vmem:[%s5 + $0x1e8] sm:$0xff]
  %v406 = vld [vmem:[%s5 + $0x1f0] sm:$0xff]
  %v407 = vld [vmem:[%s5 + $0x1f8] sm:$0xff]
  %v408 = vld [vmem:[%s5 + $0x200] sm:$0xff]
  %v409 = vld [vmem:[%s5 + $0x208] sm:$0xff]
  %v410 = vld [vmem:[%s5 + $0x210] sm:$0xff]
  %v411 = vld [vmem:[%s5 + $0x218] sm:$0xff]
  %v412 = vld [vmem:[%s5 + $0x220] sm:$0xff]
  %v413 = vld [vmem:[%s5 + $0x228] sm:$0xff]
  %v414 = vld [vmem:[%s5 + $0x230] sm:$0xff]
  %v415 = vld [vmem:[%s5 + $0x238] sm:$0xff]
  %v416 = vld [vmem:[%s5 + $0x240] sm:$0xff]
  %v417 = vld [vmem:[%s5 + $0x248] sm:$0xff]
  %v418 = vld [vmem:[%s5 + $0x250] sm:$0xff]
  %v419 = vld [vmem:[%s5 + $0x258] sm:$0xff]
  %v420 = vld [vmem:[%s5 + $0x260] sm:$0xff]
  %v421 = vld [vmem:[%s5 + $0x268] sm:$0xff]
  %v422 = vld [vmem:[%s5 + $0x270] sm:$0xff]
  %v423 = vld [vmem:[%s5 + $0x278] sm:$0xff]
  %v424 = vld [vmem:[%s5 + $0x280] sm:$0xff]
  %v425 = vld [vmem:[%s5 + $0x288] sm:$0xff]
  %v426 = vld [vmem:[%s5 + $0x290] sm:$0xff]
  %v427 = vld [vmem:[%s5 + $0x298] sm:$0xff]
  %v428 = vld [vmem:[%s5 + $0x2a0] sm:$0xff]
  %v429 = vld [vmem:[%s5 + $0x2a8] sm:$0xff]
  %v430 = vld [vmem:[%s5 + $0x2b0] sm:$0xff]
  %v431 = vld [vmem:[%s5 + $0x2b8] sm:$0xff]
  %v432 = vld [vmem:[%s5 + $0x2c0] sm:$0xff]
  %v433 = vld [vmem:[%s5 + $0x2c8] sm:$0xff]
  %v434 = vld [vmem:[%s5 + $0x2d0] sm:$0xff]
  %v435 = vld [vmem:[%s5 + $0x2d8] sm:$0xff]
  %v436 = vld [vmem:[%s5 + $0x2e0] sm:$0xff]
  %v437 = vld [vmem:[%s5 + $0x2e8] sm:$0xff]
  %v438 = vld [vmem:[%s5 + $0x2f0] sm:$0xff]
  %v439 = vld [vmem:[%s5 + $0x2f8] sm:$0xff]
  %v440 = vld [vmem:[%s5 + $0x300] sm:$0xff]
  %v441 = vld [vmem:[%s5 + $0x308] sm:$0xff]
  %v442 = vld [vmem:[%s5 + $0x310] sm:$0xff]
  %v443 = vld [vmem:[%s5 + $0x318] sm:$0xff]
  %v444 = vld [vmem:[%s5 + $0x320] sm:$0xff]
  %v445 = vld [vmem:[%s5 + $0x328] sm:$0xff]
  %v446 = vld [vmem:[%s5 + $0x330] sm:$0xff]
  %v447 = vld [vmem:[%s5 + $0x338] sm:$0xff]
  %v448 = vld [vmem:[%s5 + $0x340] sm:$0xff]
  %v449 = vld [vmem:[%s5 + $0x348] sm:$0xff]
  %v450 = vld [vmem:[%s5 + $0x350] sm:$0xff]
  %v451 = vld [vmem:[%s5 + $0x358] sm:$0xff]
  %v452 = vld [vmem:[%s5 + $0x360] sm:$0xff]
  %v453 = vld [vmem:[%s5 + $0x368] sm:$0xff]
  %v454 = vld [vmem:[%s5 + $0x370] sm:$0xff]
  %v455 = vld [vmem:[%s5 + $0x378] sm:$0xff]
  %v456 = vld [vmem:[%s5 + $0x380] sm:$0xff]
  %v457 = vld [vmem:[%s5 + $0x388] sm:$0xff]
  %v458 = vld [vmem:[%s5 + $0x390] sm:$0xff]
  %v459 = vld [vmem:[%s5 + $0x398] sm:$0xff]
  %v460 = vld [vmem:[%s5 + $0x3a0] sm:$0xff]
  %v461 = vld [vmem:[%s5 + $0x3a8] sm:$0xff]
  %v462 = vld [vmem:[%s5 + $0x3b0] sm:$0xff]
  %v463 = vld [vmem:[%s5 + $0x3b8] sm:$0xff]
  %v464 = vld [vmem:[%s5 + $0x3c0] sm:$0xff]
  %v465 = vld [vmem:[%s5 + $0x3c8] sm:$0xff]
  %v466 = vld [vmem:[%s5 + $0x3d0] sm:$0xff]
  %v467 = vld [vmem:[%s5 + $0x3d8] sm:$0xff]
  %v468 = vld [vmem:[%s5 + $0x3e0] sm:$0xff]
  %v469 = vld [vmem:[%s5 + $0x3e8] sm:$0xff]
  %v470 = vld [vmem:[%s5 + $0x3f0] sm:$0xff]
  %v471 = vld [vmem:[%s5 + $0x3f8] sm:$0xff]
  %v472 = vld [vmem:[%s5 + $0x400] sm:$0xff]
  %v473 = vld [vmem:[%s5 + $0x408] sm:$0xff]
  %v474 = vld [vmem:[%s5 + $0x410] sm:$0xff]
  %v475 = vld [vmem:[%s5 + $0x418] sm:$0xff]
  %v476 = vld [vmem:[%s5 + $0x420] sm:$0xff]
  %v477 = vld [vmem:[%s5 + $0x428] sm:$0xff]
  %v478 = vld [vmem:[%s5 + $0x430] sm:$0xff]
  %v479 = vld [vmem:[%s5 + $0x438] sm:$0xff]
  %v480 = vld [vmem:[%s5 + $0x440] sm:$0xff]
  %v481 = vld [vmem:[%s5 + $0x448] sm:$0xff]
  %v482 = vld [vmem:[%s5 + $0x450] sm:$0xff]
  %v483 = vld [vmem:[%s5 + $0x458] sm:$0xff]
  %v484 = vld [vmem:[%s5 + $0x460] sm:$0xff]
  %v485 = vld [vmem:[%s5 + $0x468] sm:$0xff]
  %v486 = vld [vmem:[%s5 + $0x470] sm:$0xff]
  %v487 = vld [vmem:[%s5 + $0x478] sm:$0xff]
  %488 = vmatprep.subr.mxu0 %v345
  %489 = vmatpush1.msra.mxu0 %v344
  %490 = vmatprep.subr.mxu0 %v348
  %491 = vmatpush1.msra.mxu0 %v347
  %492 = vmatprep.subr.mxu0 %v351
  %493 = vmatpush1.msra.mxu0 %v350
  %494 = vmatprep.subr.mxu0 %v354
  %495 = vmatpush1.msra.mxu0 %v353
  %496 = vmatprep.subr.mxu0 %v357
  %497 = vmatpush1.msra.mxu0 %v356
  %498 = vmatprep.subr.mxu0 %v360
  %499 = vmatpush1.msra.mxu0 %v359
  %500 = vmatprep.subr.mxu0 %v363
  %501 = vmatpush1.msra.mxu0 %v362
  %502 = vmatprep.subr.mxu0 %v366
  %503 = vmatpush1.msra.mxu0 %v365
  %504 = vmatprep.subr.mxu0 %v369
  %505 = vmatpush1.msra.mxu0 %v368
  %506 = vmatprep.subr.mxu0 %v372
  %507 = vmatpush1.msra.mxu0 %v371
  %508 = vmatprep.subr.mxu0 %v375
  %509 = vmatpush1.msra.mxu0 %v374
  %510 = vmatprep.subr.mxu0 %v378
  %511 = vmatpush1.msra.mxu0 %v377
  %512 = vmatprep.subr.mxu0 %v381
  %513 = vmatpush1.msra.mxu0 %v380
  %514 = vmatprep.subr.mxu0 %v384
  %515 = vmatpush1.msra.mxu0 %v383
  %516 = vmatprep.subr.mxu0 %v387
  %517 = vmatpush1.msra.mxu0 %v386
  %518 = vmatprep.subr.mxu0 %v390
  %519 = vmatpush1.msra.mxu0 %v389
  %520 = vmatprep.subr.mxu0 %v393
  %521 = vmatpush1.msra.mxu0 %v392
  %522 = vmatprep.subr.mxu0 %v396
  %523 = vmatpush1.msra.mxu0 %v395
  %524 = vmatprep.subr.mxu0 %v399
  %525 = vmatpush1.msra.mxu0 %v398
  %526 = vmatprep.subr.mxu0 %v402
  %527 = vmatpush1.msra.mxu0 %v401
  %528 = vmatprep.subr.mxu0 %v405
  %529 = vmatpush1.msra.mxu0 %v404
  %530 = vmatprep.subr.mxu0 %v408
  %531 = vmatpush1.msra.mxu0 %v407
  %532 = vmatprep.subr.mxu0 %v411
  %533 = vmatpush1.msra.mxu0 %v410
  %534 = vmatprep.subr.mxu0 %v414
  %535 = vmatpush1.msra.mxu0 %v413
  %536 = vmatprep.subr.mxu0 %v417
  %537 = vmatpush1.msra.mxu0 %v416
  %538 = vmatprep.subr.mxu0 %v420
  %539 = vmatpush1.msra.mxu0 %v419
  %540 = vmatprep.subr.mxu0 %v423
  %541 = vmatpush1.msra.mxu0 %v422
  %542 = vmatprep.subr.mxu0 %v426
  %543 = vmatpush1.msra.mxu0 %v425
  %544 = vmatprep.subr.mxu0 %v429
  %545 = vmatpush1.msra.mxu0 %v428
  %546 = vmatprep.subr.mxu0 %v432
  %547 = vmatpush1.msra.mxu0 %v431
  %548 = vmatprep.subr.mxu0 %v435
  %549 = vmatpush1.msra.mxu0 %v434
  %550 = vmatprep.subr.mxu0 %v438
  %551 = vmatpush1.msra.mxu0 %v437
  %552 = vmatprep.mubr.f32.mxu0 %v342
  %553 = vmatmul.mubr.f32.gmra.mrb[0].mxu0 %v341
  %v554 = vpop.f32.mrb[0].mxu0
  %v555 = vadd.f32 0.0, %v554
  %v556 = vpop.f32.mrb[0].mxu0
  %v557 = vadd.f32 0.0, %v556
  %558 = vdwg.mxu0
  %559 = vmatprep.subr.mxu0 %v441
  %560 = vmatpush1.msra.mxu0 %v440
  %561 = vmatprep.subr.mxu0 %v444
  %562 = vmatpush1.msra.mxu0 %v443
  %563 = vmatprep.subr.mxu0 %v447
  %564 = vmatpush1.msra.mxu0 %v446
  %565 = vmatprep.subr.mxu0 %v450
  %566 = vmatpush1.msra.mxu0 %v449
  %567 = vmatprep.subr.mxu0 %v453
  %568 = vmatpush1.msra.mxu0 %v452
  %569 = vmatprep.subr.mxu0 %v456
  %570 = vmatpush1.msra.mxu0 %v455
  %571 = vmatprep.subr.mxu0 %v459
  %572 = vmatpush1.msra.mxu0 %v458
  %573 = vmatprep.subr.mxu0 %v462
  %574 = vmatpush1.msra.mxu0 %v461
  %575 = vmatprep.subr.mxu0 %v465
  %576 = vmatpush1.msra.mxu0 %v464
  %577 = vmatprep.subr.mxu0 %v468
  %578 = vmatpush1.msra.mxu0 %v467
  %579 = vmatprep.subr.mxu0 %v471
  %580 = vmatpush1.msra.mxu0 %v470
  %581 = vmatprep.subr.mxu0 %v474
  %582 = vmatpush1.msra.mxu0 %v473
  %583 = vmatprep.subr.mxu0 %v477
  %584 = vmatpush1.msra.mxu0 %v476
  %585 = vmatprep.subr.mxu0 %v480
  %586 = vmatpush1.msra.mxu0 %v479
  %587 = vmatprep.subr.mxu0 %v483
  %588 = vmatpush1.msra.mxu0 %v482
  %589 = vmatprep.subr.mxu0 %v486
  %590 = vmatpush1.msra.mxu0 %v485
  %591 = vmatprep.subr.mxu0 0.0
  %592 = vmatpush1.msra.mxu0 0.0
  %593 = vmatprep.subr.mxu0 0.0
  %594 = vmatpush1.msra.mxu0 0.0
  %595 = vmatprep.subr.mxu0 0.0
  %596 = vmatpush1.msra.mxu0 0.0
  %597 = vmatprep.subr.mxu0 0.0
  %598 = vmatpush1.msra.mxu0 0.0
  %599 = vmatprep.subr.mxu0 0.0
  %600 = vmatpush1.msra.mxu0 0.0
  %601 = vmatprep.subr.mxu0 0.0
  %602 = vmatpush1.msra.mxu0 0.0
  %603 = vmatprep.subr.mxu0 0.0
  %604 = vmatpush1.msra.mxu0 0.0
  %605 = vmatprep.subr.mxu0 0.0
  %606 = vmatpush1.msra.mxu0 0.0
  %607 = vmatprep.subr.mxu0 0.0
  %608 = vmatpush1.msra.mxu0 0.0
  %609 = vmatprep.subr.mxu0 0.0
  %610 = vmatpush1.msra.mxu0 0.0
  %611 = vmatprep.subr.mxu0 0.0
  %612 = vmatpush1.msra.mxu0 0.0
  %613 = vmatprep.subr.mxu0 0.0
  %614 = vmatpush1.msra.mxu0 0.0
  %615 = vmatprep.subr.mxu0 0.0
  %616 = vmatpush1.msra.mxu0 0.0
  %617 = vmatprep.subr.mxu0 0.0
  %618 = vmatpush1.msra.mxu0 0.0
  %619 = vmatprep.subr.mxu0 0.0
  %620 = vmatpush1.msra.mxu0 0.0
  %621 = vmatprep.subr.mxu0 0.0
  %622 = vmatpush1.msra.mxu0 0.0
  %623 = vmatprep.mubr.f32.mxu0 0.0
  %624 = vmatmul.mubr.f32.gmra.mrb[0].mxu0 %v343
  %v625 = vpop.f32.mrb[0].mxu0
  %v626 = vadd.f32 %v555, %v625
  %v627 = vpop.f32.mrb[0].mxu0
  %v628 = vadd.f32 %v557, %v627
  %629 = vdwg.mxu0
  %630 = vmatprep.subr.mxu0 0.0
  %631 = vmatpush1.msra.mxu0 %v346
  %632 = vmatprep.subr.mxu0 0.0
  %633 = vmatpush1.msra.mxu0 %v349
  %634 = vmatprep.subr.mxu0 0.0
  %635 = vmatpush1.msra.mxu0 %v352
  %636 = vmatprep.subr.mxu0 0.0
  %637 = vmatpush1.msra.mxu0 %v355
  %638 = vmatprep.subr.mxu0 0.0
  %639 = vmatpush1.msra.mxu0 %v358
  %640 = vmatprep.subr.mxu0 0.0
  %641 = vmatpush1.msra.mxu0 %v361
  %642 = vmatprep.subr.mxu0 0.0
  %643 = vmatpush1.msra.mxu0 %v364
  %644 = vmatprep.subr.mxu0 0.0
  %645 = vmatpush1.msra.mxu0 %v367
  %646 = vmatprep.subr.mxu0 0.0
  %647 = vmatpush1.msra.mxu0 %v370
  %648 = vmatprep.subr.mxu0 0.0
  %649 = vmatpush1.msra.mxu0 %v373
  %650 = vmatprep.subr.mxu0 0.0
  %651 = vmatpush1.msra.mxu0 %v376
  %652 = vmatprep.subr.mxu0 0.0
  %653 = vmatpush1.msra.mxu0 %v379
  %654 = vmatprep.subr.mxu0 0.0
  %655 = vmatpush1.msra.mxu0 %v382
  %656 = vmatprep.subr.mxu0 0.0
  %657 = vmatpush1.msra.mxu0 %v385
  %658 = vmatprep.subr.mxu0 0.0
  %659 = vmatpush1.msra.mxu0 %v388
  %660 = vmatprep.subr.mxu0 0.0
  %661 = vmatpush1.msra.mxu0 %v391
  %662 = vmatprep.subr.mxu0 0.0
  %663 = vmatpush1.msra.mxu0 %v394
  %664 = vmatprep.subr.mxu0 0.0
  %665 = vmatpush1.msra.mxu0 %v397
  %666 = vmatprep.subr.mxu0 0.0
  %667 = vmatpush1.msra.mxu0 %v400
  %668 = vmatprep.subr.mxu0 0.0
  %669 = vmatpush1.msra.mxu0 %v403
  %670 = vmatprep.subr.mxu0 0.0
  %671 = vmatpush1.msra.mxu0 %v406
  %672 = vmatprep.subr.mxu0 0.0
  %673 = vmatpush1.msra.mxu0 %v409
  %674 = vmatprep.subr.mxu0 0.0
  %675 = vmatpush1.msra.mxu0 %v412
  %676 = vmatprep.subr.mxu0 0.0
  %677 = vmatpush1.msra.mxu0 %v415
  %678 = vmatprep.subr.mxu0 0.0
  %679 = vmatpush1.msra.mxu0 %v418
  %680 = vmatprep.subr.mxu0 0.0
  %681 = vmatpush1.msra.mxu0 %v421
  %682 = vmatprep.subr.mxu0 0.0
  %683 = vmatpush1.msra.mxu0 %v424
  %684 = vmatprep.subr.mxu0 0.0
  %685 = vmatpush1.msra.mxu0 %v427
  %686 = vmatprep.subr.mxu0 0.0
  %687 = vmatpush1.msra.mxu0 %v430
  %688 = vmatprep.subr.mxu0 0.0
  %689 = vmatpush1.msra.mxu0 %v433
  %690 = vmatprep.subr.mxu0 0.0
  %691 = vmatpush1.msra.mxu0 %v436
  %692 = vmatprep.subr.mxu0 0.0
  %693 = vmatpush1.msra.mxu0 %v439
  %694 = vmatprep.mubr.f32.mxu0 %v342
  %695 = vmatmul.mubr.f32.gmra.mrb[0].mxu0 %v341
  %v696 = vpop.f32.mrb[0].mxu0
  %v697 = vadd.f32 0.0, %v696
  %v698 = vpop.f32.mrb[0].mxu0
  %699 = vdwg.mxu0
  %700 = vmatprep.subr.mxu0 0.0
  %701 = vmatpush1.msra.mxu0 %v442
  %702 = vmatprep.subr.mxu0 0.0
  %703 = vmatpush1.msra.mxu0 %v445
  %704 = vmatprep.subr.mxu0 0.0
  %705 = vmatpush1.msra.mxu0 %v448
  %706 = vmatprep.subr.mxu0 0.0
  %707 = vmatpush1.msra.mxu0 %v451
  %708 = vmatprep.subr.mxu0 0.0
  %709 = vmatpush1.msra.mxu0 %v454
  %710 = vmatprep.subr.mxu0 0.0
  %711 = vmatpush1.msra.mxu0 %v457
  %712 = vmatprep.subr.mxu0 0.0
  %713 = vmatpush1.msra.mxu0 %v460
  %714 = vmatprep.subr.mxu0 0.0
  %715 = vmatpush1.msra.mxu0 %v463
  %716 = vmatprep.subr.mxu0 0.0
  %717 = vmatpush1.msra.mxu0 %v466
  %718 = vmatprep.subr.mxu0 0.0
  %719 = vmatpush1.msra.mxu0 %v469
  %720 = vmatprep.subr.mxu0 0.0
  %721 = vmatpush1.msra.mxu0 %v472
  %722 = vmatprep.subr.mxu0 0.0
  %723 = vmatpush1.msra.mxu0 %v475
  %724 = vmatprep.subr.mxu0 0.0
  %725 = vmatpush1.msra.mxu0 %v478
  %726 = vmatprep.subr.mxu0 0.0
  %727 = vmatpush1.msra.mxu0 %v481
  %728 = vmatprep.subr.mxu0 0.0
  %729 = vmatpush1.msra.mxu0 %v484
  %730 = vmatprep.subr.mxu0 0.0
  %731 = vmatpush1.msra.mxu0 %v487
  %732 = vmatprep.subr.mxu0 0.0
  %733 = vmatpush1.msra.mxu0 0.0
  %734 = vmatprep.subr.mxu0 0.0
  %735 = vmatpush1.msra.mxu0 0.0
  %736 = vmatprep.subr.mxu0 0.0
  %737 = vmatpush1.msra.mxu0 0.0
  %738 = vmatprep.subr.mxu0 0.0
  %739 = vmatpush1.msra.mxu0 0.0
  %740 = vmatprep.subr.mxu0 0.0
  %741 = vmatpush1.msra.mxu0 0.0
  %742 = vmatprep.subr.mxu0 0.0
  %743 = vmatpush1.msra.mxu0 0.0
  %744 = vmatprep.subr.mxu0 0.0
  %745 = vmatpush1.msra.mxu0 0.0
  %746 = vmatprep.subr.mxu0 0.0
  %747 = vmatpush1.msra.mxu0 0.0
  %748 = vmatprep.subr.mxu0 0.0
  %749 = vmatpush1.msra.mxu0 0.0
  %750 = vmatprep.subr.mxu0 0.0
  %751 = vmatpush1.msra.mxu0 0.0
  %752 = vmatprep.subr.mxu0 0.0
  %753 = vmatpush1.msra.mxu0 0.0
  %754 = vmatprep.subr.mxu0 0.0
  %755 = vmatpush1.msra.mxu0 0.0
  %756 = vmatprep.subr.mxu0 0.0
  %757 = vmatpush1.msra.mxu0 0.0
  %758 = vmatprep.subr.mxu0 0.0
  %759 = vmatpush1.msra.mxu0 0.0
  %760 = vmatprep.subr.mxu0 0.0
  %761 = vmatpush1.msra.mxu0 0.0
  %762 = vmatprep.subr.mxu0 0.0
  %763 = vmatpush1.msra.mxu0 0.0
  %764 = vmatprep.mubr.f32.mxu0 0.0
  %765 = vmatmul.mubr.f32.gmra.mrb[0].mxu0 %v343
  %v766 = vpop.f32.mrb[0].mxu0
  %v767 = vadd.f32 %v697, %v766
  %v768 = vpop.f32.mrb[0].mxu0
  %769 = vdwg.mxu0
  %v770 = vrot.slane %v626, 4
  %v771 = vadd.f32 %v626, %v770
  %v772 = vrot.slane %v771, 2
  %v773 = vadd.f32 %v771, %v772
  %v774 = vrot.slane %v773, 1
  %v775 = vadd.f32 %v773, %v774
  %v776 = vrot.slane %v628, 4
  %v777 = vadd.f32 %v628, %v776
  %v778 = vrot.slane %v777, 2
  %v779 = vadd.f32 %v777, %v778
  %v780 = vrot.slane %v779, 1
  %v781 = vadd.f32 %v779, %v780
  %v782 = vsel %vm89, %v767, 0.0
  %v783 = vrot.slane %v782, 4
  %v784 = vadd.f32 %v782, %v783
  %v785 = vrot.slane %v784, 2
  %v786 = vadd.f32 %v784, %v785
  %v787 = vrot.slane %v786, 1
  %v788 = vadd.f32 %v786, %v787
  %v789 = vmul.f32 %v626, %v626
  %v790 = vmul.f32 %v628, %v628
  %v791 = vmul.f32 %v767, %v767
  %v792 = vrot.slane %v789, 4
  %v793 = vadd.f32 %v789, %v792
  %v794 = vrot.slane %v793, 2
  %v795 = vadd.f32 %v793, %v794
  %v796 = vrot.slane %v795, 1
  %v797 = vadd.f32 %v795, %v796
  %v798 = vrot.slane %v790, 4
  %v799 = vadd.f32 %v790, %v798
  %v800 = vrot.slane %v799, 2
  %v801 = vadd.f32 %v799, %v800
  %v802 = vrot.slane %v801, 1
  %v803 = vadd.f32 %v801, %v802
  %v804 = vsel %vm89, %v791, 0.0
  %v805 = vrot.slane %v804, 4
  %v806 = vadd.f32 %v804, %v805
  %v807 = vrot.slane %v806, 2
  %v808 = vadd.f32 %v806, %v807
  %v809 = vrot.slane %v808, 1
  %v810 = vadd.f32 %v808, %v809
  %vm811 = vcmask 1040384
  %v812 = vsel %vm811, %v775, %v797
  %v813 = vsel %vm811, %v781, %v803
  %v814 = vsel %vm811, %v788, %v810
  %v815 = vld [vmem:[%s8] sm:$0xff]
  %v816 = vld [vmem:[%s8 + $0x8] sm:$0xff]
  %v817 = vld [vmem:[%s8 + $0x10] sm:$0xff]
  %v818 = vld [vmem:[%s8 + $0x18] sm:$0xff]
  %v819 = vld [vmem:[%s8 + $0x20] sm:$0xff]
  %v820 = vld [vmem:[%s8 + $0x28] sm:$0xff]
  %v821 = vld [vmem:[%s8 + $0x30] sm:$0xff]
  %v822 = vld [vmem:[%s8 + $0x38] sm:$0xff]
  %v823 = vld [vmem:[%s8 + $0x40] sm:$0xff]
  %v824 = vld [vmem:[%s8 + $0x48] sm:$0xff]
  %v825 = vld [vmem:[%s8 + $0x50] sm:$0xff]
  %v826 = vld [vmem:[%s8 + $0x58] sm:$0xff]
  %v827 = vld [vmem:[%s8 + $0x60] sm:$0xff]
  %v828 = vld [vmem:[%s8 + $0x68] sm:$0xff]
  %v829 = vld [vmem:[%s8 + $0x70] sm:$0xff]
  %v830 = vld [vmem:[%s8 + $0x78] sm:$0xff]
  %v831 = vld [vmem:[%s8 + $0x80] sm:$0xff]
  %v832 = vld [vmem:[%s8 + $0x88] sm:$0xff]
  %v833 = vld [vmem:[%s8 + $0x90] sm:$0xff]
  %v834 = vld [vmem:[%s8 + $0x98] sm:$0xff]
  %v835 = vld [vmem:[%s8 + $0xa0] sm:$0xff]
  %v836 = vld [vmem:[%s8 + $0xa8] sm:$0xff]
  %v837 = vld [vmem:[%s8 + $0xb0] sm:$0xff]
  %v838 = vld [vmem:[%s8 + $0xb8] sm:$0xff]
  %v839 = vld [vmem:[%s8 + $0xc0] sm:$0xff]
  %v840 = vld [vmem:[%s8 + $0xc8] sm:$0xff]
  %v841 = vld [vmem:[%s8 + $0xd0] sm:$0xff]
  %v842 = vld [vmem:[%s8 + $0xd8] sm:$0xff]
  %v843 = vld [vmem:[%s8 + $0xe0] sm:$0xff]
  %v844 = vld [vmem:[%s8 + $0xe8] sm:$0xff]
  %v845 = vld [vmem:[%s8 + $0xf0] sm:$0xff]
  %v846 = vld [vmem:[%s8 + $0xf8] sm:$0xff]
  %v847 = vld [vmem:[%s8 + $0x100] sm:$0xff]
  %v848 = vld [vmem:[%s8 + $0x108] sm:$0xff]
  %v849 = vld [vmem:[%s8 + $0x110] sm:$0xff]
  %v850 = vld [vmem:[%s8 + $0x118] sm:$0xff]
  %v852 = vsel %vm89, %v814, 0
  %854 = vmatprep.subr.mxu0 0.0
  %855 = vmatpush1.msra.mxu0 %v815
  %856 = vmatprep.subr.mxu0 0.0
  %857 = vmatpush1.msra.mxu0 %v816
  %858 = vmatprep.subr.mxu0 0.0
  %859 = vmatpush1.msra.mxu0 %v817
  %860 = vmatprep.subr.mxu0 0.0
  %861 = vmatpush1.msra.mxu0 %v818
  %862 = vmatprep.subr.mxu0 0.0
  %863 = vmatpush1.msra.mxu0 %v819
  %864 = vmatprep.subr.mxu0 0.0
  %865 = vmatpush1.msra.mxu0 %v820
  %866 = vmatprep.subr.mxu0 0.0
  %867 = vmatpush1.msra.mxu0 %v821
  %868 = vmatprep.subr.mxu0 0.0
  %869 = vmatpush1.msra.mxu0 %v822
  %870 = vmatprep.subr.mxu0 0.0
  %871 = vmatpush1.msra.mxu0 %v823
  %872 = vmatprep.subr.mxu0 0.0
  %873 = vmatpush1.msra.mxu0 %v824
  %874 = vmatprep.subr.mxu0 0.0
  %875 = vmatpush1.msra.mxu0 %v825
  %876 = vmatprep.subr.mxu0 0.0
  %877 = vmatpush1.msra.mxu0 %v826
  %878 = vmatprep.subr.mxu0 0.0
  %879 = vmatpush1.msra.mxu0 %v827
  %880 = vmatprep.subr.mxu0 0.0
  %881 = vmatpush1.msra.mxu0 %v828
  %882 = vmatprep.subr.mxu0 0.0
  %883 = vmatpush1.msra.mxu0 %v829
  %884 = vmatprep.subr.mxu0 0.0
  %885 = vmatpush1.msra.mxu0 %v830
  %886 = vmatprep.subr.mxu0 0.0
  %887 = vmatpush1.msra.mxu0 %v831
  %888 = vmatprep.subr.mxu0 0.0
  %889 = vmatpush1.msra.mxu0 %v832
  %890 = vmatprep.subr.mxu0 0.0
  %891 = vmatpush1.msra.mxu0 %v833
  %892 = vmatprep.subr.mxu0 0.0
  %893 = vmatpush1.msra.mxu0 %v834
  %894 = vmatprep.subr.mxu0 0.0
  %895 = vmatpush1.msra.mxu0 %v835
  %896 = vmatprep.subr.mxu0 0.0
  %897 = vmatpush1.msra.mxu0 %v836
  %898 = vmatprep.subr.mxu0 0.0
  %899 = vmatpush1.msra.mxu0 %v837
  %900 = vmatprep.subr.mxu0 0.0
  %901 = vmatpush1.msra.mxu0 %v838
  %902 = vmatprep.subr.mxu0 0.0
  %903 = vmatpush1.msra.mxu0 %v839
  %904 = vmatprep.subr.mxu0 0.0
  %905 = vmatpush1.msra.mxu0 %v840
  %906 = vmatprep.subr.mxu0 0.0
  %907 = vmatpush1.msra.mxu0 %v841
  %908 = vmatprep.subr.mxu0 0.0
  %909 = vmatpush1.msra.mxu0 %v842
  %910 = vmatprep.subr.mxu0 0.0
  %911 = vmatpush1.msra.mxu0 %v843
  %912 = vmatprep.subr.mxu0 0.0
  %913 = vmatpush1.msra.mxu0 %v844
  %914 = vmatprep.subr.mxu0 0.0
  %915 = vmatpush1.msra.mxu0 %v845
  %916 = vmatprep.subr.mxu0 0.0
  %917 = vmatpush1.msra.mxu0 %v846
  %918 = vmatprep.mubr.f32.mxu0 %v813
  %919 = vmatmul.mubr.f32.gmra.mrb[0].mxu0 %v812
  %v920 = vpop.f32.mrb[0].mxu0
  %v921 = vadd.f32 0.0, %v920
  %v922 = vpop.f32.mrb[0].mxu0
  %923 = vdwg.mxu0
  %924 = vmatprep.subr.mxu0 0.0
  %925 = vmatpush1.msra.mxu0 %v847
  %926 = vmatprep.subr.mxu0 0.0
  %927 = vmatpush1.msra.mxu0 %v848
  %928 = vmatprep.subr.mxu0 0.0
  %929 = vmatpush1.msra.mxu0 %v849
  %930 = vmatprep.subr.mxu0 0.0
  %931 = vmatpush1.msra.mxu0 %v850
  %932 = vmatprep.subr.mxu0 0.0
  %933 = vmatpush1.msra.mxu0 0.0
  %934 = vmatprep.subr.mxu0 0.0
  %935 = vmatpush1.msra.mxu0 0.0
  %936 = vmatprep.subr.mxu0 0.0
  %937 = vmatpush1.msra.mxu0 0.0
  %938 = vmatprep.subr.mxu0 0.0
  %939 = vmatpush1.msra.mxu0 0.0
  %940 = vmatprep.subr.mxu0 0.0
  %941 = vmatpush1.msra.mxu0 0.0
  %942 = vmatprep.subr.mxu0 0.0
  %943 = vmatpush1.msra.mxu0 0.0
  %944 = vmatprep.subr.mxu0 0.0
  %945 = vmatpush1.msra.mxu0 0.0
  %946 = vmatprep.subr.mxu0 0.0
  %947 = vmatpush1.msra.mxu0 0.0
  %948 = vmatprep.subr.mxu0 0.0
  %949 = vmatpush1.msra.mxu0 0.0
  %950 = vmatprep.subr.mxu0 0.0
  %951 = vmatpush1.msra.mxu0 0.0
  %952 = vmatprep.subr.mxu0 0.0
  %953 = vmatpush1.msra.mxu0 0.0
  %954 = vmatprep.subr.mxu0 0.0
  %955 = vmatpush1.msra.mxu0 0.0
  %956 = vmatprep.subr.mxu0 0.0
  %957 = vmatpush1.msra.mxu0 0.0
  %958 = vmatprep.subr.mxu0 0.0
  %959 = vmatpush1.msra.mxu0 0.0
  %960 = vmatprep.subr.mxu0 0.0
  %961 = vmatpush1.msra.mxu0 0.0
  %962 = vmatprep.subr.mxu0 0.0
  %963 = vmatpush1.msra.mxu0 0.0
  %964 = vmatprep.subr.mxu0 0.0
  %965 = vmatpush1.msra.mxu0 0.0
  %966 = vmatprep.subr.mxu0 0.0
  %967 = vmatpush1.msra.mxu0 0.0
  %968 = vmatprep.subr.mxu0 0.0
  %969 = vmatpush1.msra.mxu0 0.0
  %970 = vmatprep.subr.mxu0 0.0
  %971 = vmatpush1.msra.mxu0 0.0
  %972 = vmatprep.subr.mxu0 0.0
  %973 = vmatpush1.msra.mxu0 0.0
  %974 = vmatprep.subr.mxu0 0.0
  %975 = vmatpush1.msra.mxu0 0.0
  %976 = vmatprep.subr.mxu0 0.0
  %977 = vmatpush1.msra.mxu0 0.0
  %978 = vmatprep.subr.mxu0 0.0
  %979 = vmatpush1.msra.mxu0 0.0
  %980 = vmatprep.subr.mxu0 0.0
  %981 = vmatpush1.msra.mxu0 0.0
  %982 = vmatprep.subr.mxu0 0.0
  %983 = vmatpush1.msra.mxu0 0.0
  %984 = vmatprep.subr.mxu0 0.0
  %985 = vmatpush1.msra.mxu0 0.0
  %986 = vmatprep.subr.mxu0 0.0
  %987 = vmatpush1.msra.mxu0 0.0
  %988 = vmatprep.mubr.f32.mxu0 0.0
  %989 = vmatmul.mubr.f32.gmra.mrb[0].mxu0 %v852
  %v990 = vpop.f32.mrb[0].mxu0
  %v991 = vadd.f32 %v921, %v990
  %v992 = vpop.f32.mrb[0].mxu0
  %993 = vdwg.mxu0
  %v994 = vrcp.pop 312.0
  %v995 = vmul.f32 %v991, %v994
  %v996 = vmul.f32 %v995, %v995
  %v998 = vrot.slane %v996, 7
  %v1000 = vsub.f32 %v995, %v998
  %v1001 = vmax.f32 %v1000, 0.0
  %v1002 = vld [vmem:[%s6] sm:$0x1]
  %v1003 = vadd.f32 %v1001, 1e-05
  %v1004 = vrsqrt.pop %v1003
  %v1007 = vunpack.c.l.s4 1966171168
  %v1008 = vunpack.c.0.s8 %v1007
  %v1009 = vlaneseq
  %v1010 = vshrl.u32 %v1009, 7
  %v1011 = vsub.s32 %v1008, %v1010
  %v1012 = vrot.slane %v1004, %v1011
  %v1013 = vcombine.high %v1012, %v1012
  %v1015 = vunpack.c.l.s4 1966171168
  %v1016 = vunpack.c.0.s8 %v1015
  %v1017 = vlaneseq
  %v1018 = vshrl.u32 %v1017, 7
  %v1019 = vsub.s32 %v1016, %v1018
  %v1020 = vrot.slane %v1013, %v1019
  %v1022 = vmul.f32 %v1002, %v1020
  %v1023 = vld [vmem:[%s7] sm:$0x1]
  %v1024 = vmul.f32 %v995, %v1022
  %v1025 = vsub.f32 %v1023, %v1024
  %v1027 = vlaneseq
  %v1028 = vshrl.u32 %v1027, 7
  %v1029 = vsub.s32 0, %v1028
  %v1030 = vrot.slane %v1025, %v1029
  %v1032 = vsel %vm811, %v1022, %v1030
  %v1033 = vld [vmem:[%s9] sm:$0xff]
  %v1034 = vld [vmem:[%s9 + $0x8] sm:$0xff]
  %v1035 = vld [vmem:[%s9 + $0x10] sm:$0xff]
  %v1036 = vld [vmem:[%s9 + $0x18] sm:$0xff]
  %v1037 = vld [vmem:[%s9 + $0x20] sm:$0xff]
  %v1038 = vld [vmem:[%s9 + $0x28] sm:$0xff]
  %v1039 = vld [vmem:[%s9 + $0x30] sm:$0xff]
  %v1040 = vld [vmem:[%s9 + $0x38] sm:$0xff]
  %v1041 = vld [vmem:[%s9 + $0x40] sm:$0xff]
  %v1042 = vld [vmem:[%s9 + $0x48] sm:$0xff]
  %v1043 = vld [vmem:[%s9 + $0x50] sm:$0xff]
  %v1044 = vld [vmem:[%s9 + $0x58] sm:$0xff]
  %v1045 = vld [vmem:[%s9 + $0x60] sm:$0xff]
  %v1046 = vld [vmem:[%s9 + $0x68] sm:$0xff]
  %v1047 = vld [vmem:[%s9 + $0x70] sm:$0xff]
  %v1048 = vld [vmem:[%s9 + $0x78] sm:$0xff]
  %v1049 = vld [vmem:[%s9 + $0x80] sm:$0xff]
  %v1050 = vld [vmem:[%s9 + $0x88] sm:$0xff]
  %vm1051 = vcmask 392192
  %v1053 = vsel %vm1051, %v1032, 0
  %1055 = vmatprep.subr.mxu0 %v1034
  %1056 = vmatpush1.msra.mxu0 %v1033
  %1057 = vmatprep.subr.mxu0 %v1037
  %1058 = vmatpush1.msra.mxu0 %v1036
  %1059 = vmatprep.subr.mxu0 %v1040
  %1060 = vmatpush1.msra.mxu0 %v1039
  %1061 = vmatprep.subr.mxu0 %v1043
  %1062 = vmatpush1.msra.mxu0 %v1042
  %1063 = vmatprep.subr.mxu0 %v1046
  %1064 = vmatpush1.msra.mxu0 %v1045
  %1065 = vmatprep.subr.mxu0 %v1049
  %1066 = vmatpush1.msra.mxu0 %v1048
  %1067 = vmatprep.subr.mxu0 0.0
  %1068 = vmatpush1.msra.mxu0 0.0
  %1069 = vmatprep.subr.mxu0 0.0
  %1070 = vmatpush1.msra.mxu0 0.0
  %1071 = vmatprep.subr.mxu0 0.0
  %1072 = vmatpush1.msra.mxu0 0.0
  %1073 = vmatprep.subr.mxu0 0.0
  %1074 = vmatpush1.msra.mxu0 0.0
  %1075 = vmatprep.subr.mxu0 0.0
  %1076 = vmatpush1.msra.mxu0 0.0
  %1077 = vmatprep.subr.mxu0 0.0
  %1078 = vmatpush1.msra.mxu0 0.0
  %1079 = vmatprep.subr.mxu0 0.0
  %1080 = vmatpush1.msra.mxu0 0.0
  %1081 = vmatprep.subr.mxu0 0.0
  %1082 = vmatpush1.msra.mxu0 0.0
  %1083 = vmatprep.subr.mxu0 0.0
  %1084 = vmatpush1.msra.mxu0 0.0
  %1085 = vmatprep.subr.mxu0 0.0
  %1086 = vmatpush1.msra.mxu0 0.0
  %1087 = vmatprep.subr.mxu0 0.0
  %1088 = vmatpush1.msra.mxu0 0.0
  %1089 = vmatprep.subr.mxu0 0.0
  %1090 = vmatpush1.msra.mxu0 0.0
  %1091 = vmatprep.subr.mxu0 0.0
  %1092 = vmatpush1.msra.mxu0 0.0
  %1093 = vmatprep.subr.mxu0 0.0
  %1094 = vmatpush1.msra.mxu0 0.0
  %1095 = vmatprep.subr.mxu0 0.0
  %1096 = vmatpush1.msra.mxu0 0.0
  %1097 = vmatprep.subr.mxu0 0.0
  %1098 = vmatpush1.msra.mxu0 0.0
  %1099 = vmatprep.subr.mxu0 0.0
  %1100 = vmatpush1.msra.mxu0 0.0
  %1101 = vmatprep.subr.mxu0 0.0
  %1102 = vmatpush1.msra.mxu0 0.0
  %1103 = vmatprep.subr.mxu0 0.0
  %1104 = vmatpush1.msra.mxu0 0.0
  %1105 = vmatprep.subr.mxu0 0.0
  %1106 = vmatpush1.msra.mxu0 0.0
  %1107 = vmatprep.subr.mxu0 0.0
  %1108 = vmatpush1.msra.mxu0 0.0
  %1109 = vmatprep.subr.mxu0 0.0
  %1110 = vmatpush1.msra.mxu0 0.0
  %1111 = vmatprep.subr.mxu0 0.0
  %1112 = vmatpush1.msra.mxu0 0.0
  %1113 = vmatprep.subr.mxu0 0.0
  %1114 = vmatpush1.msra.mxu0 0.0
  %1115 = vmatprep.subr.mxu0 0.0
  %1116 = vmatpush1.msra.mxu0 0.0
  %1117 = vmatprep.subr.mxu0 0.0
  %1118 = vmatpush1.msra.mxu0 0.0
  %1119 = vmatprep.mubr.f32.mxu0 0.0
  %1120 = vmatmul.mubr.f32.gmra.mrb[0].mxu0 %v1053
  %v1121 = vpop.f32.mrb[0].mxu0
  %v1122 = vadd.f32 0.0, %v1121
  %v1123 = vpop.f32.mrb[0].mxu0
  %v1124 = vadd.f32 0.0, %v1123
  %1125 = vdwg.mxu0
  %1126 = vmatprep.subr.mxu0 0.0
  %1127 = vmatpush1.msra.mxu0 %v1035
  %1128 = vmatprep.subr.mxu0 0.0
  %1129 = vmatpush1.msra.mxu0 %v1038
  %1130 = vmatprep.subr.mxu0 0.0
  %1131 = vmatpush1.msra.mxu0 %v1041
  %1132 = vmatprep.subr.mxu0 0.0
  %1133 = vmatpush1.msra.mxu0 %v1044
  %1134 = vmatprep.subr.mxu0 0.0
  %1135 = vmatpush1.msra.mxu0 %v1047
  %1136 = vmatprep.subr.mxu0 0.0
  %1137 = vmatpush1.msra.mxu0 %v1050
  %1138 = vmatprep.subr.mxu0 0.0
  %1139 = vmatpush1.msra.mxu0 0.0
  %1140 = vmatprep.subr.mxu0 0.0
  %1141 = vmatpush1.msra.mxu0 0.0
  %1142 = vmatprep.subr.mxu0 0.0
  %1143 = vmatpush1.msra.mxu0 0.0
  %1144 = vmatprep.subr.mxu0 0.0
  %1145 = vmatpush1.msra.mxu0 0.0
  %1146 = vmatprep.subr.mxu0 0.0
  %1147 = vmatpush1.msra.mxu0 0.0
  %1148 = vmatprep.subr.mxu0 0.0
  %1149 = vmatpush1.msra.mxu0 0.0
  %1150 = vmatprep.subr.mxu0 0.0
  %1151 = vmatpush1.msra.mxu0 0.0
  %1152 = vmatprep.subr.mxu0 0.0
  %1153 = vmatpush1.msra.mxu0 0.0
  %1154 = vmatprep.subr.mxu0 0.0
  %1155 = vmatpush1.msra.mxu0 0.0
  %1156 = vmatprep.subr.mxu0 0.0
  %1157 = vmatpush1.msra.mxu0 0.0
  %1158 = vmatprep.subr.mxu0 0.0
  %1159 = vmatpush1.msra.mxu0 0.0
  %1160 = vmatprep.subr.mxu0 0.0
  %1161 = vmatpush1.msra.mxu0 0.0
  %1162 = vmatprep.subr.mxu0 0.0
  %1163 = vmatpush1.msra.mxu0 0.0
  %1164 = vmatprep.subr.mxu0 0.0
  %1165 = vmatpush1.msra.mxu0 0.0
  %1166 = vmatprep.subr.mxu0 0.0
  %1167 = vmatpush1.msra.mxu0 0.0
  %1168 = vmatprep.subr.mxu0 0.0
  %1169 = vmatpush1.msra.mxu0 0.0
  %1170 = vmatprep.subr.mxu0 0.0
  %1171 = vmatpush1.msra.mxu0 0.0
  %1172 = vmatprep.subr.mxu0 0.0
  %1173 = vmatpush1.msra.mxu0 0.0
  %1174 = vmatprep.subr.mxu0 0.0
  %1175 = vmatpush1.msra.mxu0 0.0
  %1176 = vmatprep.subr.mxu0 0.0
  %1177 = vmatpush1.msra.mxu0 0.0
  %1178 = vmatprep.subr.mxu0 0.0
  %1179 = vmatpush1.msra.mxu0 0.0
  %1180 = vmatprep.subr.mxu0 0.0
  %1181 = vmatpush1.msra.mxu0 0.0
  %1182 = vmatprep.subr.mxu0 0.0
  %1183 = vmatpush1.msra.mxu0 0.0
  %1184 = vmatprep.subr.mxu0 0.0
  %1185 = vmatpush1.msra.mxu0 0.0
  %1186 = vmatprep.subr.mxu0 0.0
  %1187 = vmatpush1.msra.mxu0 0.0
  %1188 = vmatprep.subr.mxu0 0.0
  %1189 = vmatpush1.msra.mxu0 0.0
  %1190 = vmatprep.mubr.f32.mxu0 0.0
  %1191 = vmatmul.mubr.f32.gmra.mrb[0].mxu0 %v1053
  %v1192 = vpop.f32.mrb[0].mxu0
  %v1193 = vadd.f32 0.0, %v1192
  %v1194 = vpop.f32.mrb[0].mxu0
  %1195 = vdwg.mxu0
  %v1196 = vlaneseq
  %v1197 = vshrl.u32 %v1196, 7
  %v1198 = vsub.s32 0, %v1197
  %v1199 = vrot.slane %v1122, %v1198
  %v1200 = vlaneseq
  %v1201 = vshrl.u32 %v1200, 7
  %v1202 = vsub.s32 0, %v1201
  %v1203 = vrot.slane %v1124, %v1202
  %v1204 = vlaneseq
  %v1205 = vshrl.u32 %v1204, 7
  %v1206 = vsub.s32 0, %v1205
  %v1207 = vrot.slane %v1193, %v1206
  %v1208 = vmul.f32 %v626, %v1199
  %v1209 = vmul.f32 %v628, %v1203
  %v1210 = vmul.f32 %v767, %v1207
  %v1211 = vlaneseq
  %v1212 = vshrl.u32 %v1211, 7
  %v1213 = vsub.s32 1, %v1212
  %v1214 = vrot.slane %v1122, %v1213
  %v1215 = vlaneseq
  %v1216 = vshrl.u32 %v1215, 7
  %v1217 = vsub.s32 1, %v1216
  %v1218 = vrot.slane %v1124, %v1217
  %v1219 = vlaneseq
  %v1220 = vshrl.u32 %v1219, 7
  %v1221 = vsub.s32 1, %v1220
  %v1222 = vrot.slane %v1193, %v1221
  %v1223 = vadd.f32 %v1208, %v1214
  %v1224 = vadd.f32 %v1209, %v1218
  %v1225 = vadd.f32 %v1210, %v1222
  %v1226 = vmax.f32 %v1223, 0.0
  %v1227 = vmax.f32 %v1224, 0.0
  %v1228 = vmax.f32 %v1225, 0.0
  %v1229 = vmax.f32 %v1025, 0.0
  %v1230 = vld [vmem:[%s10] sm:$0xff]
  %v1231 = vld [vmem:[%s10 + $0x8] sm:$0xff]
  %v1232 = vld [vmem:[%s10 + $0x10] sm:$0xff]
  %v1233 = vld [vmem:[%s10 + $0x18] sm:$0xff]
  %v1234 = vld [vmem:[%s10 + $0x20] sm:$0xff]
  %v1235 = vld [vmem:[%s10 + $0x28] sm:$0xff]
  %v1236 = vld [vmem:[%s10 + $0x30] sm:$0xff]
  %v1237 = vld [vmem:[%s10 + $0x38] sm:$0xff]
  %v1238 = vld [vmem:[%s10 + $0x40] sm:$0xff]
  %v1239 = vld [vmem:[%s10 + $0x48] sm:$0xff]
  %v1240 = vld [vmem:[%s10 + $0x50] sm:$0xff]
  %v1241 = vld [vmem:[%s10 + $0x58] sm:$0xff]
  %v1242 = vld [vmem:[%s10 + $0x60] sm:$0xff]
  %v1243 = vld [vmem:[%s10 + $0x68] sm:$0xff]
  %v1244 = vld [vmem:[%s10 + $0x70] sm:$0xff]
  %v1245 = vld [vmem:[%s10 + $0x78] sm:$0xff]
  %v1246 = vld [vmem:[%s10 + $0x80] sm:$0xff]
  %v1247 = vld [vmem:[%s10 + $0x88] sm:$0xff]
  %v1248 = vld [vmem:[%s10 + $0x90] sm:$0xff]
  %v1249 = vld [vmem:[%s10 + $0x98] sm:$0xff]
  %v1250 = vld [vmem:[%s10 + $0xa0] sm:$0xff]
  %v1251 = vld [vmem:[%s10 + $0xa8] sm:$0xff]
  %v1252 = vld [vmem:[%s10 + $0xb0] sm:$0xff]
  %v1253 = vld [vmem:[%s10 + $0xb8] sm:$0xff]
  %v1254 = vld [vmem:[%s10 + $0xc0] sm:$0xff]
  %v1255 = vld [vmem:[%s10 + $0xc8] sm:$0xff]
  %v1256 = vld [vmem:[%s10 + $0xd0] sm:$0xff]
  %v1257 = vld [vmem:[%s10 + $0xd8] sm:$0xff]
  %v1258 = vld [vmem:[%s10 + $0xe0] sm:$0xff]
  %v1259 = vld [vmem:[%s10 + $0xe8] sm:$0xff]
  %v1260 = vld [vmem:[%s10 + $0xf0] sm:$0xff]
  %v1261 = vld [vmem:[%s10 + $0xf8] sm:$0xff]
  %v1262 = vld [vmem:[%s10 + $0x100] sm:$0xff]
  %v1263 = vld [vmem:[%s10 + $0x108] sm:$0xff]
  %v1264 = vld [vmem:[%s10 + $0x110] sm:$0xff]
  %v1265 = vld [vmem:[%s10 + $0x118] sm:$0xff]
  %v1266 = vld [vmem:[%s10 + $0x120] sm:$0xff]
  %v1267 = vld [vmem:[%s10 + $0x128] sm:$0xff]
  %v1268 = vld [vmem:[%s10 + $0x130] sm:$0xff]
  %v1269 = vld [vmem:[%s10 + $0x138] sm:$0xff]
  %v1270 = vld [vmem:[%s10 + $0x140] sm:$0xff]
  %v1271 = vld [vmem:[%s10 + $0x148] sm:$0xff]
  %v1272 = vld [vmem:[%s10 + $0x150] sm:$0xff]
  %v1273 = vld [vmem:[%s10 + $0x158] sm:$0xff]
  %v1274 = vld [vmem:[%s10 + $0x160] sm:$0xff]
  %v1275 = vld [vmem:[%s10 + $0x168] sm:$0xff]
  %v1276 = vld [vmem:[%s10 + $0x170] sm:$0xff]
  %v1277 = vld [vmem:[%s10 + $0x178] sm:$0xff]
  %v1278 = vld [vmem:[%s10 + $0x180] sm:$0xff]
  %v1279 = vld [vmem:[%s10 + $0x188] sm:$0xff]
  %v1280 = vld [vmem:[%s10 + $0x190] sm:$0xff]
  %v1281 = vld [vmem:[%s10 + $0x198] sm:$0xff]
  %v1282 = vld [vmem:[%s10 + $0x1a0] sm:$0xff]
  %v1283 = vld [vmem:[%s10 + $0x1a8] sm:$0xff]
  %v1284 = vld [vmem:[%s10 + $0x1b0] sm:$0xff]
  %v1285 = vld [vmem:[%s10 + $0x1b8] sm:$0xff]
  %v1286 = vld [vmem:[%s10 + $0x1c0] sm:$0xff]
  %v1287 = vld [vmem:[%s10 + $0x1c8] sm:$0xff]
  %v1288 = vld [vmem:[%s10 + $0x1d0] sm:$0xff]
  %v1289 = vld [vmem:[%s10 + $0x1d8] sm:$0xff]
  %v1290 = vld [vmem:[%s10 + $0x1e0] sm:$0xff]
  %v1291 = vld [vmem:[%s10 + $0x1e8] sm:$0xff]
  %v1292 = vld [vmem:[%s10 + $0x1f0] sm:$0xff]
  %v1293 = vld [vmem:[%s10 + $0x1f8] sm:$0xff]
  %v1294 = vld [vmem:[%s10 + $0x200] sm:$0xff]
  %v1295 = vld [vmem:[%s10 + $0x208] sm:$0xff]
  %v1296 = vld [vmem:[%s10 + $0x210] sm:$0xff]
  %v1297 = vld [vmem:[%s10 + $0x218] sm:$0xff]
  %v1298 = vld [vmem:[%s10 + $0x220] sm:$0xff]
  %v1299 = vld [vmem:[%s10 + $0x228] sm:$0xff]
  %v1300 = vld [vmem:[%s10 + $0x230] sm:$0xff]
  %v1301 = vld [vmem:[%s10 + $0x238] sm:$0xff]
  %v1303 = vsel %vm89, %v1228, 0
  %1305 = vmatprep.subr.mxu0 %v1231
  %1306 = vmatpush1.msra.mxu0 %v1230
  %1307 = vmatprep.subr.mxu0 %v1233
  %1308 = vmatpush1.msra.mxu0 %v1232
  %1309 = vmatprep.subr.mxu0 %v1235
  %1310 = vmatpush1.msra.mxu0 %v1234
  %1311 = vmatprep.subr.mxu0 %v1237
  %1312 = vmatpush1.msra.mxu0 %v1236
  %1313 = vmatprep.subr.mxu0 %v1239
  %1314 = vmatpush1.msra.mxu0 %v1238
  %1315 = vmatprep.subr.mxu0 %v1241
  %1316 = vmatpush1.msra.mxu0 %v1240
  %1317 = vmatprep.subr.mxu0 %v1243
  %1318 = vmatpush1.msra.mxu0 %v1242
  %1319 = vmatprep.subr.mxu0 %v1245
  %1320 = vmatpush1.msra.mxu0 %v1244
  %1321 = vmatprep.subr.mxu0 %v1247
  %1322 = vmatpush1.msra.mxu0 %v1246
  %1323 = vmatprep.subr.mxu0 %v1249
  %1324 = vmatpush1.msra.mxu0 %v1248
  %1325 = vmatprep.subr.mxu0 %v1251
  %1326 = vmatpush1.msra.mxu0 %v1250
  %1327 = vmatprep.subr.mxu0 %v1253
  %1328 = vmatpush1.msra.mxu0 %v1252
  %1329 = vmatprep.subr.mxu0 %v1255
  %1330 = vmatpush1.msra.mxu0 %v1254
  %1331 = vmatprep.subr.mxu0 %v1257
  %1332 = vmatpush1.msra.mxu0 %v1256
  %1333 = vmatprep.subr.mxu0 %v1259
  %1334 = vmatpush1.msra.mxu0 %v1258
  %1335 = vmatprep.subr.mxu0 %v1261
  %1336 = vmatpush1.msra.mxu0 %v1260
  %1337 = vmatprep.subr.mxu0 %v1263
  %1338 = vmatpush1.msra.mxu0 %v1262
  %1339 = vmatprep.subr.mxu0 %v1265
  %1340 = vmatpush1.msra.mxu0 %v1264
  %1341 = vmatprep.subr.mxu0 %v1267
  %1342 = vmatpush1.msra.mxu0 %v1266
  %1343 = vmatprep.subr.mxu0 %v1269
  %1344 = vmatpush1.msra.mxu0 %v1268
  %1345 = vmatprep.subr.mxu0 %v1271
  %1346 = vmatpush1.msra.mxu0 %v1270
  %1347 = vmatprep.subr.mxu0 %v1273
  %1348 = vmatpush1.msra.mxu0 %v1272
  %1349 = vmatprep.subr.mxu0 %v1275
  %1350 = vmatpush1.msra.mxu0 %v1274
  %1351 = vmatprep.subr.mxu0 %v1277
  %1352 = vmatpush1.msra.mxu0 %v1276
  %1353 = vmatprep.subr.mxu0 %v1279
  %1354 = vmatpush1.msra.mxu0 %v1278
  %1355 = vmatprep.subr.mxu0 %v1281
  %1356 = vmatpush1.msra.mxu0 %v1280
  %1357 = vmatprep.subr.mxu0 %v1283
  %1358 = vmatpush1.msra.mxu0 %v1282
  %1359 = vmatprep.subr.mxu0 %v1285
  %1360 = vmatpush1.msra.mxu0 %v1284
  %1361 = vmatprep.subr.mxu0 %v1287
  %1362 = vmatpush1.msra.mxu0 %v1286
  %1363 = vmatprep.subr.mxu0 %v1289
  %1364 = vmatpush1.msra.mxu0 %v1288
  %1365 = vmatprep.subr.mxu0 %v1291
  %1366 = vmatpush1.msra.mxu0 %v1290
  %1367 = vmatprep.subr.mxu0 %v1293
  %1368 = vmatpush1.msra.mxu0 %v1292
  %1369 = vmatprep.mubr.f32.mxu0 %v1227
  %1370 = vmatmul.mubr.f32.gmra.mrb[0].mxu0 %v1226
  %v1371 = vpop.f32.mrb[0].mxu0
  %v1372 = vadd.f32 0.0, %v1371
  %v1373 = vpop.f32.mrb[0].mxu0
  %v1374 = vadd.f32 0.0, %v1373
  %1375 = vdwg.mxu0
  %1376 = vmatprep.subr.mxu0 %v1295
  %1377 = vmatpush1.msra.mxu0 %v1294
  %1378 = vmatprep.subr.mxu0 %v1297
  %1379 = vmatpush1.msra.mxu0 %v1296
  %1380 = vmatprep.subr.mxu0 %v1299
  %1381 = vmatpush1.msra.mxu0 %v1298
  %1382 = vmatprep.subr.mxu0 %v1301
  %1383 = vmatpush1.msra.mxu0 %v1300
  %1384 = vmatprep.subr.mxu0 0.0
  %1385 = vmatpush1.msra.mxu0 0.0
  %1386 = vmatprep.subr.mxu0 0.0
  %1387 = vmatpush1.msra.mxu0 0.0
  %1388 = vmatprep.subr.mxu0 0.0
  %1389 = vmatpush1.msra.mxu0 0.0
  %1390 = vmatprep.subr.mxu0 0.0
  %1391 = vmatpush1.msra.mxu0 0.0
  %1392 = vmatprep.subr.mxu0 0.0
  %1393 = vmatpush1.msra.mxu0 0.0
  %1394 = vmatprep.subr.mxu0 0.0
  %1395 = vmatpush1.msra.mxu0 0.0
  %1396 = vmatprep.subr.mxu0 0.0
  %1397 = vmatpush1.msra.mxu0 0.0
  %1398 = vmatprep.subr.mxu0 0.0
  %1399 = vmatpush1.msra.mxu0 0.0
  %1400 = vmatprep.subr.mxu0 0.0
  %1401 = vmatpush1.msra.mxu0 0.0
  %1402 = vmatprep.subr.mxu0 0.0
  %1403 = vmatpush1.msra.mxu0 0.0
  %1404 = vmatprep.subr.mxu0 0.0
  %1405 = vmatpush1.msra.mxu0 0.0
  %1406 = vmatprep.subr.mxu0 0.0
  %1407 = vmatpush1.msra.mxu0 0.0
  %1408 = vmatprep.subr.mxu0 0.0
  %1409 = vmatpush1.msra.mxu0 0.0
  %1410 = vmatprep.subr.mxu0 0.0
  %1411 = vmatpush1.msra.mxu0 0.0
  %1412 = vmatprep.subr.mxu0 0.0
  %1413 = vmatpush1.msra.mxu0 0.0
  %1414 = vmatprep.subr.mxu0 0.0
  %1415 = vmatpush1.msra.mxu0 0.0
  %1416 = vmatprep.subr.mxu0 0.0
  %1417 = vmatpush1.msra.mxu0 0.0
  %1418 = vmatprep.subr.mxu0 0.0
  %1419 = vmatpush1.msra.mxu0 0.0
  %1420 = vmatprep.subr.mxu0 0.0
  %1421 = vmatpush1.msra.mxu0 0.0
  %1422 = vmatprep.subr.mxu0 0.0
  %1423 = vmatpush1.msra.mxu0 0.0
  %1424 = vmatprep.subr.mxu0 0.0
  %1425 = vmatpush1.msra.mxu0 0.0
  %1426 = vmatprep.subr.mxu0 0.0
  %1427 = vmatpush1.msra.mxu0 0.0
  %1428 = vmatprep.subr.mxu0 0.0
  %1429 = vmatpush1.msra.mxu0 0.0
  %1430 = vmatprep.subr.mxu0 0.0
  %1431 = vmatpush1.msra.mxu0 0.0
  %1432 = vmatprep.subr.mxu0 0.0
  %1433 = vmatpush1.msra.mxu0 0.0
  %1434 = vmatprep.subr.mxu0 0.0
  %1435 = vmatpush1.msra.mxu0 0.0
  %1436 = vmatprep.subr.mxu0 0.0
  %1437 = vmatpush1.msra.mxu0 0.0
  %1438 = vmatprep.subr.mxu0 0.0
  %1439 = vmatpush1.msra.mxu0 0.0
  %1440 = vmatprep.mubr.f32.mxu0 0.0
  %1441 = vmatmul.mubr.f32.gmra.mrb[0].mxu0 %v1303
  %v1442 = vpop.f32.mrb[0].mxu0
  %v1443 = vadd.f32 %v1372, %v1442
  %v1444 = vpop.f32.mrb[0].mxu0
  %v1445 = vadd.f32 %v1374, %v1444
  %1446 = vdwg.mxu0
  %v1447 = vld [vmem:[%s11] sm:$0xff]
  %v1448 = vld [vmem:[%s11 + $0x8] sm:$0xff]
  %v1449 = vld [vmem:[%s11 + $0x10] sm:$0xff]
  %v1450 = vld [vmem:[%s11 + $0x18] sm:$0xff]
  %v1451 = vld [vmem:[%s11 + $0x20] sm:$0xff]
  %v1452 = vld [vmem:[%s11 + $0x28] sm:$0xff]
  %v1454 = vsel %vm1051, %v1229, 0
  %1456 = vmatprep.subr.mxu0 0.0
  %1457 = vmatpush1.msra.mxu0 %v1447
  %1458 = vmatprep.subr.mxu0 0.0
  %1459 = vmatpush1.msra.mxu0 %v1448
  %1460 = vmatprep.subr.mxu0 0.0
  %1461 = vmatpush1.msra.mxu0 %v1449
  %1462 = vmatprep.subr.mxu0 0.0
  %1463 = vmatpush1.msra.mxu0 %v1450
  %1464 = vmatprep.subr.mxu0 0.0
  %1465 = vmatpush1.msra.mxu0 %v1451
  %1466 = vmatprep.subr.mxu0 0.0
  %1467 = vmatpush1.msra.mxu0 %v1452
  %1468 = vmatprep.subr.mxu0 0.0
  %1469 = vmatpush1.msra.mxu0 0.0
  %1470 = vmatprep.subr.mxu0 0.0
  %1471 = vmatpush1.msra.mxu0 0.0
  %1472 = vmatprep.subr.mxu0 0.0
  %1473 = vmatpush1.msra.mxu0 0.0
  %1474 = vmatprep.subr.mxu0 0.0
  %1475 = vmatpush1.msra.mxu0 0.0
  %1476 = vmatprep.subr.mxu0 0.0
  %1477 = vmatpush1.msra.mxu0 0.0
  %1478 = vmatprep.subr.mxu0 0.0
  %1479 = vmatpush1.msra.mxu0 0.0
  %1480 = vmatprep.subr.mxu0 0.0
  %1481 = vmatpush1.msra.mxu0 0.0
  %1482 = vmatprep.subr.mxu0 0.0
  %1483 = vmatpush1.msra.mxu0 0.0
  %1484 = vmatprep.subr.mxu0 0.0
  %1485 = vmatpush1.msra.mxu0 0.0
  %1486 = vmatprep.subr.mxu0 0.0
  %1487 = vmatpush1.msra.mxu0 0.0
  %1488 = vmatprep.subr.mxu0 0.0
  %1489 = vmatpush1.msra.mxu0 0.0
  %1490 = vmatprep.subr.mxu0 0.0
  %1491 = vmatpush1.msra.mxu0 0.0
  %1492 = vmatprep.subr.mxu0 0.0
  %1493 = vmatpush1.msra.mxu0 0.0
  %1494 = vmatprep.subr.mxu0 0.0
  %1495 = vmatpush1.msra.mxu0 0.0
  %1496 = vmatprep.subr.mxu0 0.0
  %1497 = vmatpush1.msra.mxu0 0.0
  %1498 = vmatprep.subr.mxu0 0.0
  %1499 = vmatpush1.msra.mxu0 0.0
  %1500 = vmatprep.subr.mxu0 0.0
  %1501 = vmatpush1.msra.mxu0 0.0
  %1502 = vmatprep.subr.mxu0 0.0
  %1503 = vmatpush1.msra.mxu0 0.0
  %1504 = vmatprep.subr.mxu0 0.0
  %1505 = vmatpush1.msra.mxu0 0.0
  %1506 = vmatprep.subr.mxu0 0.0
  %1507 = vmatpush1.msra.mxu0 0.0
  %1508 = vmatprep.subr.mxu0 0.0
  %1509 = vmatpush1.msra.mxu0 0.0
  %1510 = vmatprep.subr.mxu0 0.0
  %1511 = vmatpush1.msra.mxu0 0.0
  %1512 = vmatprep.subr.mxu0 0.0
  %1513 = vmatpush1.msra.mxu0 0.0
  %1514 = vmatprep.subr.mxu0 0.0
  %1515 = vmatpush1.msra.mxu0 0.0
  %1516 = vmatprep.subr.mxu0 0.0
  %1517 = vmatpush1.msra.mxu0 0.0
  %1518 = vmatprep.subr.mxu0 0.0
  %1519 = vmatpush1.msra.mxu0 0.0
  %1520 = vmatprep.mubr.f32.mxu0 0.0
  %1521 = vmatmul.mubr.f32.gmra.mrb[0].mxu0 %v1454
  %v1522 = vpop.f32.mrb[0].mxu0
  %v1523 = vadd.f32 0.0, %v1522
  %v1524 = vpop.f32.mrb[0].mxu0
  %1525 = vdwg.mxu0
  %v1526 = vrot.slane %v1443, 4
  %v1527 = vadd.f32 %v1443, %v1526
  %v1528 = vrot.slane %v1527, 2
  %v1529 = vadd.f32 %v1527, %v1528
  %v1530 = vrot.slane %v1529, 1
  %v1531 = vadd.f32 %v1529, %v1530
  %vm1532 = vcmask 523264
  %v1533 = vsel %vm1532, %v1445, 0.0
  %v1534 = vrot.slane %v1533, 4
  %v1535 = vadd.f32 %v1533, %v1534
  %v1536 = vrot.slane %v1535, 2
  %v1537 = vadd.f32 %v1535, %v1536
  %v1538 = vrot.slane %v1537, 1
  %v1539 = vadd.f32 %v1537, %v1538
  %v1540 = vmul.f32 %v1443, %v1443
  %v1541 = vmul.f32 %v1445, %v1445
  %v1542 = vrot.slane %v1540, 4
  %v1543 = vadd.f32 %v1540, %v1542
  %v1544 = vrot.slane %v1543, 2
  %v1545 = vadd.f32 %v1543, %v1544
  %v1546 = vrot.slane %v1545, 1
  %v1547 = vadd.f32 %v1545, %v1546
  %v1548 = vsel %vm1532, %v1541, 0.0
  %v1549 = vrot.slane %v1548, 4
  %v1550 = vadd.f32 %v1548, %v1549
  %v1551 = vrot.slane %v1550, 2
  %v1552 = vadd.f32 %v1550, %v1551
  %v1553 = vrot.slane %v1552, 1
  %v1554 = vadd.f32 %v1552, %v1553
  %v1555 = vsel %vm811, %v1531, %v1547
  %v1556 = vsel %vm811, %v1539, %v1554
  %v1557 = vld [vmem:[%s14] sm:$0xff]
  %v1558 = vld [vmem:[%s14 + $0x8] sm:$0xff]
  %v1559 = vld [vmem:[%s14 + $0x10] sm:$0xff]
  %v1560 = vld [vmem:[%s14 + $0x18] sm:$0xff]
  %v1561 = vld [vmem:[%s14 + $0x20] sm:$0xff]
  %v1562 = vld [vmem:[%s14 + $0x28] sm:$0xff]
  %v1563 = vld [vmem:[%s14 + $0x30] sm:$0xff]
  %v1564 = vld [vmem:[%s14 + $0x38] sm:$0xff]
  %v1565 = vld [vmem:[%s14 + $0x40] sm:$0xff]
  %v1566 = vld [vmem:[%s14 + $0x48] sm:$0xff]
  %v1567 = vld [vmem:[%s14 + $0x50] sm:$0xff]
  %v1568 = vld [vmem:[%s14 + $0x58] sm:$0xff]
  %v1569 = vld [vmem:[%s14 + $0x60] sm:$0xff]
  %v1570 = vld [vmem:[%s14 + $0x68] sm:$0xff]
  %v1571 = vld [vmem:[%s14 + $0x70] sm:$0xff]
  %v1572 = vld [vmem:[%s14 + $0x78] sm:$0xff]
  %v1573 = vld [vmem:[%s14 + $0x80] sm:$0xff]
  %v1574 = vld [vmem:[%s14 + $0x88] sm:$0xff]
  %v1575 = vld [vmem:[%s14 + $0x90] sm:$0xff]
  %v1576 = vld [vmem:[%s14 + $0x98] sm:$0xff]
  %v1577 = vld [vmem:[%s14 + $0xa0] sm:$0xff]
  %v1578 = vld [vmem:[%s14 + $0xa8] sm:$0xff]
  %v1579 = vld [vmem:[%s14 + $0xb0] sm:$0xff]
  %v1580 = vld [vmem:[%s14 + $0xb8] sm:$0xff]
  %v1582 = vsel %vm1532, %v1556, 0
  %1584 = vmatprep.subr.mxu0 0.0
  %1585 = vmatpush1.msra.mxu0 %v1557
  %1586 = vmatprep.subr.mxu0 0.0
  %1587 = vmatpush1.msra.mxu0 %v1558
  %1588 = vmatprep.subr.mxu0 0.0
  %1589 = vmatpush1.msra.mxu0 %v1559
  %1590 = vmatprep.subr.mxu0 0.0
  %1591 = vmatpush1.msra.mxu0 %v1560
  %1592 = vmatprep.subr.mxu0 0.0
  %1593 = vmatpush1.msra.mxu0 %v1561
  %1594 = vmatprep.subr.mxu0 0.0
  %1595 = vmatpush1.msra.mxu0 %v1562
  %1596 = vmatprep.subr.mxu0 0.0
  %1597 = vmatpush1.msra.mxu0 %v1563
  %1598 = vmatprep.subr.mxu0 0.0
  %1599 = vmatpush1.msra.mxu0 %v1564
  %1600 = vmatprep.subr.mxu0 0.0
  %1601 = vmatpush1.msra.mxu0 %v1565
  %1602 = vmatprep.subr.mxu0 0.0
  %1603 = vmatpush1.msra.mxu0 %v1566
  %1604 = vmatprep.subr.mxu0 0.0
  %1605 = vmatpush1.msra.mxu0 %v1567
  %1606 = vmatprep.subr.mxu0 0.0
  %1607 = vmatpush1.msra.mxu0 %v1568
  %1608 = vmatprep.subr.mxu0 0.0
  %1609 = vmatpush1.msra.mxu0 %v1569
  %1610 = vmatprep.subr.mxu0 0.0
  %1611 = vmatpush1.msra.mxu0 %v1570
  %1612 = vmatprep.subr.mxu0 0.0
  %1613 = vmatpush1.msra.mxu0 %v1571
  %1614 = vmatprep.subr.mxu0 0.0
  %1615 = vmatpush1.msra.mxu0 %v1572
  %1616 = vmatprep.subr.mxu0 0.0
  %1617 = vmatpush1.msra.mxu0 %v1573
  %1618 = vmatprep.subr.mxu0 0.0
  %1619 = vmatpush1.msra.mxu0 %v1574
  %1620 = vmatprep.subr.mxu0 0.0
  %1621 = vmatpush1.msra.mxu0 %v1575
  %1622 = vmatprep.subr.mxu0 0.0
  %1623 = vmatpush1.msra.mxu0 %v1576
  %1624 = vmatprep.subr.mxu0 0.0
  %1625 = vmatpush1.msra.mxu0 %v1577
  %1626 = vmatprep.subr.mxu0 0.0
  %1627 = vmatpush1.msra.mxu0 %v1578
  %1628 = vmatprep.subr.mxu0 0.0
  %1629 = vmatpush1.msra.mxu0 %v1579
  %1630 = vmatprep.subr.mxu0 0.0
  %1631 = vmatpush1.msra.mxu0 %v1580
  %1632 = vmatprep.subr.mxu0 0.0
  %1633 = vmatpush1.msra.mxu0 0.0
  %1634 = vmatprep.subr.mxu0 0.0
  %1635 = vmatpush1.msra.mxu0 0.0
  %1636 = vmatprep.subr.mxu0 0.0
  %1637 = vmatpush1.msra.mxu0 0.0
  %1638 = vmatprep.subr.mxu0 0.0
  %1639 = vmatpush1.msra.mxu0 0.0
  %1640 = vmatprep.subr.mxu0 0.0
  %1641 = vmatpush1.msra.mxu0 0.0
  %1642 = vmatprep.subr.mxu0 0.0
  %1643 = vmatpush1.msra.mxu0 0.0
  %1644 = vmatprep.subr.mxu0 0.0
  %1645 = vmatpush1.msra.mxu0 0.0
  %1646 = vmatprep.subr.mxu0 0.0
  %1647 = vmatpush1.msra.mxu0 0.0
  %1648 = vmatprep.mubr.f32.mxu0 %v1582
  %1649 = vmatmul.mubr.f32.gmra.mrb[0].mxu0 %v1555
  %v1650 = vpop.f32.mrb[0].mxu0
  %v1651 = vadd.f32 0.0, %v1650
  %v1652 = vpop.f32.mrb[0].mxu0
  %1653 = vdwg.mxu0
  %v1654 = vmul.f32 %v1523, 40.0
  %v1655 = vadd.f32 %v1651, %v1654
  %v1656 = vmul.f32 %v1654, %v1523
  %v1658 = vrot.slane %v1656, 7
  %v1660 = vadd.f32 %v1651, %v1658
  %v1661 = vrcp.pop 552.0
  %v1662 = vmul.f32 %v1655, %v1661
  %v1663 = vmul.f32 %v1660, %v1661
  %v1664 = vmul.f32 %v1662, %v1662
  %v1666 = vrot.slane %v1664, 7
  %v1668 = vsub.f32 %v1663, %v1666
  %v1669 = vmax.f32 %v1668, 0.0
  %v1670 = vld [vmem:[%s12] sm:$0x1]
  %v1671 = vadd.f32 %v1669, 1e-05
  %v1672 = vrsqrt.pop %v1671
  %v1675 = vunpack.c.l.s4 1966171168
  %v1676 = vunpack.c.0.s8 %v1675
  %v1677 = vlaneseq
  %v1678 = vshrl.u32 %v1677, 7
  %v1679 = vsub.s32 %v1676, %v1678
  %v1680 = vrot.slane %v1672, %v1679
  %v1681 = vcombine.high %v1680, %v1680
  %v1683 = vunpack.c.l.s4 1966171168
  %v1684 = vunpack.c.0.s8 %v1683
  %v1685 = vlaneseq
  %v1686 = vshrl.u32 %v1685, 7
  %v1687 = vsub.s32 %v1684, %v1686
  %v1688 = vrot.slane %v1681, %v1687
  %v1690 = vmul.f32 %v1670, %v1688
  %v1691 = vld [vmem:[%s13] sm:$0x1]
  %v1692 = vmul.f32 %v1662, %v1690
  %v1693 = vsub.f32 %v1691, %v1692
  %v1695 = vlaneseq
  %v1696 = vshrl.u32 %v1695, 7
  %v1697 = vsub.s32 0, %v1696
  %v1698 = vrot.slane %v1693, %v1697
  %v1700 = vsel %vm811, %v1690, %v1698
  %v1701 = vld [vmem:[%s15] sm:$0xff]
  %v1702 = vld [vmem:[%s15 + $0x8] sm:$0xff]
  %v1703 = vld [vmem:[%s15 + $0x10] sm:$0xff]
  %v1704 = vld [vmem:[%s15 + $0x18] sm:$0xff]
  %v1705 = vld [vmem:[%s15 + $0x20] sm:$0xff]
  %v1706 = vld [vmem:[%s15 + $0x28] sm:$0xff]
  %v1707 = vld [vmem:[%s15 + $0x30] sm:$0xff]
  %v1708 = vld [vmem:[%s15 + $0x38] sm:$0xff]
  %v1710 = vsel %vm89, %v1700, 0
  %1712 = vmatprep.subr.mxu0 %v1702
  %1713 = vmatpush1.msra.mxu0 %v1701
  %1714 = vmatprep.subr.mxu0 %v1704
  %1715 = vmatpush1.msra.mxu0 %v1703
  %1716 = vmatprep.subr.mxu0 %v1706
  %1717 = vmatpush1.msra.mxu0 %v1705
  %1718 = vmatprep.subr.mxu0 %v1708
  %1719 = vmatpush1.msra.mxu0 %v1707
  %1720 = vmatprep.subr.mxu0 0.0
  %1721 = vmatpush1.msra.mxu0 0.0
  %1722 = vmatprep.subr.mxu0 0.0
  %1723 = vmatpush1.msra.mxu0 0.0
  %1724 = vmatprep.subr.mxu0 0.0
  %1725 = vmatpush1.msra.mxu0 0.0
  %1726 = vmatprep.subr.mxu0 0.0
  %1727 = vmatpush1.msra.mxu0 0.0
  %1728 = vmatprep.subr.mxu0 0.0
  %1729 = vmatpush1.msra.mxu0 0.0
  %1730 = vmatprep.subr.mxu0 0.0
  %1731 = vmatpush1.msra.mxu0 0.0
  %1732 = vmatprep.subr.mxu0 0.0
  %1733 = vmatpush1.msra.mxu0 0.0
  %1734 = vmatprep.subr.mxu0 0.0
  %1735 = vmatpush1.msra.mxu0 0.0
  %1736 = vmatprep.subr.mxu0 0.0
  %1737 = vmatpush1.msra.mxu0 0.0
  %1738 = vmatprep.subr.mxu0 0.0
  %1739 = vmatpush1.msra.mxu0 0.0
  %1740 = vmatprep.subr.mxu0 0.0
  %1741 = vmatpush1.msra.mxu0 0.0
  %1742 = vmatprep.subr.mxu0 0.0
  %1743 = vmatpush1.msra.mxu0 0.0
  %1744 = vmatprep.subr.mxu0 0.0
  %1745 = vmatpush1.msra.mxu0 0.0
  %1746 = vmatprep.subr.mxu0 0.0
  %1747 = vmatpush1.msra.mxu0 0.0
  %1748 = vmatprep.subr.mxu0 0.0
  %1749 = vmatpush1.msra.mxu0 0.0
  %1750 = vmatprep.subr.mxu0 0.0
  %1751 = vmatpush1.msra.mxu0 0.0
  %1752 = vmatprep.subr.mxu0 0.0
  %1753 = vmatpush1.msra.mxu0 0.0
  %1754 = vmatprep.subr.mxu0 0.0
  %1755 = vmatpush1.msra.mxu0 0.0
  %1756 = vmatprep.subr.mxu0 0.0
  %1757 = vmatpush1.msra.mxu0 0.0
  %1758 = vmatprep.subr.mxu0 0.0
  %1759 = vmatpush1.msra.mxu0 0.0
  %1760 = vmatprep.subr.mxu0 0.0
  %1761 = vmatpush1.msra.mxu0 0.0
  %1762 = vmatprep.subr.mxu0 0.0
  %1763 = vmatpush1.msra.mxu0 0.0
  %1764 = vmatprep.subr.mxu0 0.0
  %1765 = vmatpush1.msra.mxu0 0.0
  %1766 = vmatprep.subr.mxu0 0.0
  %1767 = vmatpush1.msra.mxu0 0.0
  %1768 = vmatprep.subr.mxu0 0.0
  %1769 = vmatpush1.msra.mxu0 0.0
  %1770 = vmatprep.subr.mxu0 0.0
  %1771 = vmatpush1.msra.mxu0 0.0
  %1772 = vmatprep.subr.mxu0 0.0
  %1773 = vmatpush1.msra.mxu0 0.0
  %1774 = vmatprep.subr.mxu0 0.0
  %1775 = vmatpush1.msra.mxu0 0.0
  %1776 = vmatprep.mubr.f32.mxu0 0.0
  %1777 = vmatmul.mubr.f32.gmra.mrb[0].mxu0 %v1710
  %v1778 = vpop.f32.mrb[0].mxu0
  %v1779 = vadd.f32 0.0, %v1778
  %v1780 = vpop.f32.mrb[0].mxu0
  %v1781 = vadd.f32 0.0, %v1780
  %1782 = vdwg.mxu0
  %v1783 = vlaneseq
  %v1784 = vshrl.u32 %v1783, 7
  %v1785 = vsub.s32 0, %v1784
  %v1786 = vrot.slane %v1779, %v1785
  %v1787 = vlaneseq
  %v1788 = vshrl.u32 %v1787, 7
  %v1789 = vsub.s32 0, %v1788
  %v1790 = vrot.slane %v1781, %v1789
  %v1791 = vmul.f32 %v1443, %v1786
  %v1792 = vmul.f32 %v1445, %v1790
  %v1793 = vlaneseq
  %v1794 = vshrl.u32 %v1793, 7
  %v1795 = vsub.s32 1, %v1794
  %v1796 = vrot.slane %v1779, %v1795
  %v1797 = vlaneseq
  %v1798 = vshrl.u32 %v1797, 7
  %v1799 = vsub.s32 1, %v1798
  %v1800 = vrot.slane %v1781, %v1799
  %v1801 = vadd.f32 %v1791, %v1796
  %v1802 = vadd.f32 %v1792, %v1800
  %v1803 = vmax.f32 %v1801, 0.0
  %v1804 = vmax.f32 %v1802, 0.0
  %v1805 = vmul.f32 %v1523, %v1690
  %v1806 = vadd.f32 %v1805, %v1693
  %v1807 = vmax.f32 %v1806, 0.0
  %v1808 = vmax.f32 %v1693, 0.0
  %1809 = vst [vmem:[#allocation2] sm:$0xff] %v1803
  %1810 = vst.msk [vmem:[#allocation2 + $0x8] sm:$0xff] %vm1532, %v1804
  %v1811 = vlaneseq
  %v1812 = vshrl.u32 %v1811, 7
  %v1813 = vsub.s32 0, %v1812
  %v1814 = vrot.slane %v1807, %v1813
  %1816 = vrot.lane.b32.xlu0 %v1814, 64
  %v1817 = vpop.permute.xlu0 %1816
  %vm1819 = vcmask 785920
  %1820 = vst.msk [vmem:[#allocation2 + $0x8] sm:$0xff] %vm1819, %v1817
  %v1822 = vlaneseq
  %v1823 = vshrl.u32 %v1822, 7
  %v1824 = vsub.s32 0, %v1823
  %v1825 = vrot.slane %v1808, %v1824
  %1826 = vrot.lane.b32.xlu0 %v1825, 96
  %v1827 = vpop.permute.xlu0 %1826
  %vm1829 = vcmask 1048320
  %1830 = vst.msk [vmem:[#allocation2 + $0x8] sm:$0xff] %vm1829, %v1827
  %v1831 = vld [vmem:[#allocation2] sm:$0xff]
  %v1832 = vld [vmem:[#allocation2 + $0x8] sm:$0xff]
  %v1833 = vld [vmem:[%s16] sm:$0xff]
  %v1834 = vld [vmem:[%s16 + $0x8] sm:$0xff]
  %v1835 = vld [vmem:[%s16 + $0x10] sm:$0xff]
  %v1836 = vld [vmem:[%s16 + $0x18] sm:$0xff]
  %v1837 = vld [vmem:[%s16 + $0x20] sm:$0xff]
  %v1838 = vld [vmem:[%s16 + $0x28] sm:$0xff]
  %v1839 = vld [vmem:[%s16 + $0x30] sm:$0xff]
  %v1840 = vld [vmem:[%s16 + $0x38] sm:$0xff]
  %v1841 = vld [vmem:[%s16 + $0x40] sm:$0xff]
  %v1842 = vld [vmem:[%s16 + $0x48] sm:$0xff]
  %v1843 = vld [vmem:[%s16 + $0x50] sm:$0xff]
  %v1844 = vld [vmem:[%s16 + $0x58] sm:$0xff]
  %v1845 = vld [vmem:[%s16 + $0x60] sm:$0xff]
  %v1846 = vld [vmem:[%s16 + $0x68] sm:$0xff]
  %v1847 = vld [vmem:[%s16 + $0x70] sm:$0xff]
  %v1848 = vld [vmem:[%s16 + $0x78] sm:$0xff]
  %v1849 = vld [vmem:[%s16 + $0x80] sm:$0xff]
  %v1850 = vld [vmem:[%s16 + $0x88] sm:$0xff]
  %v1851 = vld [vmem:[%s16 + $0x90] sm:$0xff]
  %v1852 = vld [vmem:[%s16 + $0x98] sm:$0xff]
  %v1853 = vld [vmem:[%s16 + $0xa0] sm:$0xff]
  %v1854 = vld [vmem:[%s16 + $0xa8] sm:$0xff]
  %v1855 = vld [vmem:[%s16 + $0xb0] sm:$0xff]
  %v1856 = vld [vmem:[%s16 + $0xb8] sm:$0xff]
  %v1857 = vld [vmem:[%s16 + $0xc0] sm:$0xff]
  %v1858 = vld [vmem:[%s16 + $0xc8] sm:$0xff]
  %v1859 = vld [vmem:[%s16 + $0xd0] sm:$0xff]
  %v1860 = vld [vmem:[%s16 + $0xd8] sm:$0xff]
  %v1861 = vld [vmem:[%s16 + $0xe0] sm:$0xff]
  %v1862 = vld [vmem:[%s16 + $0xe8] sm:$0xff]
  %v1863 = vld [vmem:[%s16 + $0xf0] sm:$0xff]
  %v1864 = vld [vmem:[%s16 + $0xf8] sm:$0xff]
  %v1865 = vld [vmem:[%s16 + $0x100] sm:$0xff]
  %v1866 = vld [vmem:[%s16 + $0x108] sm:$0xff]
  %v1867 = vld [vmem:[%s16 + $0x110] sm:$0xff]
  %v1868 = vld [vmem:[%s16 + $0x118] sm:$0xff]
  %v1869 = vld [vmem:[%s16 + $0x120] sm:$0xff]
  %v1870 = vld [vmem:[%s16 + $0x128] sm:$0xff]
  %v1871 = vld [vmem:[%s16 + $0x130] sm:$0xff]
  %v1872 = vld [vmem:[%s16 + $0x138] sm:$0xff]
  %v1873 = vld [vmem:[%s16 + $0x140] sm:$0xff]
  %v1874 = vld [vmem:[%s16 + $0x148] sm:$0xff]
  %v1875 = vld [vmem:[%s16 + $0x150] sm:$0xff]
  %v1876 = vld [vmem:[%s16 + $0x158] sm:$0xff]
  %v1877 = vld [vmem:[%s16 + $0x160] sm:$0xff]
  %v1878 = vld [vmem:[%s16 + $0x168] sm:$0xff]
  %v1879 = vld [vmem:[%s16 + $0x170] sm:$0xff]
  %v1880 = vld [vmem:[%s16 + $0x178] sm:$0xff]
  %v1881 = vld [vmem:[%s16 + $0x180] sm:$0xff]
  %v1882 = vld [vmem:[%s16 + $0x188] sm:$0xff]
  %v1883 = vld [vmem:[%s16 + $0x190] sm:$0xff]
  %v1884 = vld [vmem:[%s16 + $0x198] sm:$0xff]
  %v1885 = vld [vmem:[%s16 + $0x1a0] sm:$0xff]
  %v1886 = vld [vmem:[%s16 + $0x1a8] sm:$0xff]
  %v1887 = vld [vmem:[%s16 + $0x1b0] sm:$0xff]
  %v1888 = vld [vmem:[%s16 + $0x1b8] sm:$0xff]
  %v1889 = vld [vmem:[%s16 + $0x1c0] sm:$0xff]
  %v1890 = vld [vmem:[%s16 + $0x1c8] sm:$0xff]
  %v1891 = vld [vmem:[%s16 + $0x1d0] sm:$0xff]
  %v1892 = vld [vmem:[%s16 + $0x1d8] sm:$0xff]
  %v1893 = vld [vmem:[%s16 + $0x1e0] sm:$0xff]
  %v1894 = vld [vmem:[%s16 + $0x1e8] sm:$0xff]
  %v1895 = vld [vmem:[%s16 + $0x1f0] sm:$0xff]
  %v1896 = vld [vmem:[%s16 + $0x1f8] sm:$0xff]
  %v1897 = vld [vmem:[%s17] sm:$0x3]
  %v1899 = vlaneseq
  %v1900 = vshrl.u32 %v1899, 7
  %v1901 = vsub.s32 0, %v1900
  %v1902 = vrot.slane %v1897, %v1901
  %v1903 = vlaneseq
  %v1904 = vshrl.u32 %v1903, 7
  %v1905 = vsub.s32 1, %v1904
  %v1906 = vrot.slane %v1897, %v1905
  %1909 = vmatprep.subr.mxu0 %v1834
  %1910 = vmatpush1.msra.mxu0 %v1833
  %1911 = vmatprep.subr.mxu0 %v1836
  %1912 = vmatpush1.msra.mxu0 %v1835
  %1913 = vmatprep.subr.mxu0 %v1838
  %1914 = vmatpush1.msra.mxu0 %v1837
  %1915 = vmatprep.subr.mxu0 %v1840
  %1916 = vmatpush1.msra.mxu0 %v1839
  %1917 = vmatprep.subr.mxu0 %v1842
  %1918 = vmatpush1.msra.mxu0 %v1841
  %1919 = vmatprep.subr.mxu0 %v1844
  %1920 = vmatpush1.msra.mxu0 %v1843
  %1921 = vmatprep.subr.mxu0 %v1846
  %1922 = vmatpush1.msra.mxu0 %v1845
  %1923 = vmatprep.subr.mxu0 %v1848
  %1924 = vmatpush1.msra.mxu0 %v1847
  %1925 = vmatprep.subr.mxu0 %v1850
  %1926 = vmatpush1.msra.mxu0 %v1849
  %1927 = vmatprep.subr.mxu0 %v1852
  %1928 = vmatpush1.msra.mxu0 %v1851
  %1929 = vmatprep.subr.mxu0 %v1854
  %1930 = vmatpush1.msra.mxu0 %v1853
  %1931 = vmatprep.subr.mxu0 %v1856
  %1932 = vmatpush1.msra.mxu0 %v1855
  %1933 = vmatprep.subr.mxu0 %v1858
  %1934 = vmatpush1.msra.mxu0 %v1857
  %1935 = vmatprep.subr.mxu0 %v1860
  %1936 = vmatpush1.msra.mxu0 %v1859
  %1937 = vmatprep.subr.mxu0 %v1862
  %1938 = vmatpush1.msra.mxu0 %v1861
  %1939 = vmatprep.subr.mxu0 %v1864
  %1940 = vmatpush1.msra.mxu0 %v1863
  %1941 = vmatprep.subr.mxu0 %v1866
  %1942 = vmatpush1.msra.mxu0 %v1865
  %1943 = vmatprep.subr.mxu0 %v1868
  %1944 = vmatpush1.msra.mxu0 %v1867
  %1945 = vmatprep.subr.mxu0 %v1870
  %1946 = vmatpush1.msra.mxu0 %v1869
  %1947 = vmatprep.subr.mxu0 %v1872
  %1948 = vmatpush1.msra.mxu0 %v1871
  %1949 = vmatprep.subr.mxu0 %v1874
  %1950 = vmatpush1.msra.mxu0 %v1873
  %1951 = vmatprep.subr.mxu0 %v1876
  %1952 = vmatpush1.msra.mxu0 %v1875
  %1953 = vmatprep.subr.mxu0 %v1878
  %1954 = vmatpush1.msra.mxu0 %v1877
  %1955 = vmatprep.subr.mxu0 %v1880
  %1956 = vmatpush1.msra.mxu0 %v1879
  %1957 = vmatprep.subr.mxu0 %v1882
  %1958 = vmatpush1.msra.mxu0 %v1881
  %1959 = vmatprep.subr.mxu0 %v1884
  %1960 = vmatpush1.msra.mxu0 %v1883
  %1961 = vmatprep.subr.mxu0 %v1886
  %1962 = vmatpush1.msra.mxu0 %v1885
  %1963 = vmatprep.subr.mxu0 %v1888
  %1964 = vmatpush1.msra.mxu0 %v1887
  %1965 = vmatprep.subr.mxu0 %v1890
  %1966 = vmatpush1.msra.mxu0 %v1889
  %1967 = vmatprep.subr.mxu0 %v1892
  %1968 = vmatpush1.msra.mxu0 %v1891
  %1969 = vmatprep.subr.mxu0 %v1894
  %1970 = vmatpush1.msra.mxu0 %v1893
  %1971 = vmatprep.subr.mxu0 %v1896
  %1972 = vmatpush1.msra.mxu0 %v1895
  %1973 = vmatprep.mubr.f32.mxu0 %v1832
  %1974 = vmatmul.mubr.f32.gmra.mrb[0].mxu0 %v1831
  %v1975 = vpop.f32.mrb[0].mxu0
  %v1976 = vadd.f32 %v1902, %v1975
  %v1977 = vpop.f32.mrb[0].mxu0
  %v1978 = vadd.f32 %v1906, %v1977
  %1979 = vdwg.mxu0
  %v1980 = vtanh.pop %v1976
  %v1981 = vtanh.pop %v1978
  %1982 = vst [vmem:[%s18] sm:$0xff] %v1980
  %1983 = vst [vmem:[%s18 + $0x8] sm:$0xff] %v1981
  // Predicated region
  $region74: #{generator_forward.1} parent=0 // pred_check
    _
  $region75: #{generator_forward.1} parent=0 // pred_check_branch
    %1985 = sbr.rel (0) target = $region77
  $region76: #{generator_forward.1} parent=0 // pred_region
    _
  $region77: #{generator_forward.1} parent=0 // pred_fallthru
    _
  // Predicated region
  $region78: #{generator_forward.1} parent=0 // pred_check
    _
  $region79: #{generator_forward.1} parent=0 // pred_check_branch
    %1987 = sbr.rel (0) target = $region81
  $region80: #{generator_forward.1} parent=0 // pred_region
    _
  $region81: #{generator_forward.1} parent=0 // pred_fallthru
    _

</llo_original>
